<compile_context>
chip_gen: v7x
topology: tpu7x:2x2x1
jax: 0.10.0
libtpu: 0.0.40
codegen_flags: <defaults>
</compile_context>

<pallas_src>
import functools
import math

import jax
import jax.numpy as jnp
import numpy as np
from jax import lax
from jax.experimental import pallas as pl
from jax.experimental.pallas import tpu as pltpu


def _round_up(x, m):
    return (x + m - 1) // m * m


def _make_gru_kernel(unroll):
    def kernel(gi_ref, whh_ref, bhn_ref, out_ref, h_s):
        # gi_ref : (TB, Bp, 3Hp) bf16   precomputed x@W_ih + folded biases (this direction)
        # whh_ref: (Hp, 3Hp)     bf16   fused recurrent weights, gates [r|z|n]
        # bhn_ref: (1, Hp)       f32    b_hh for the n gate (scaled by r)
        # out_ref: (TB, Bp, Hp)  f32    per-step hidden states
        # h_s    : (Bp, Hp)      f32    VMEM hidden carry across chunks
        d = pl.program_id(0)          # 0 = forward, 1 = backward
        c = pl.program_id(1)          # time-chunk index

        @pl.when(c == 0)
        def _init():
            h_s[...] = jnp.zeros_like(h_s)

        whh = whh_ref[...]
        bhn = bhn_ref[...]
        Hp = whh.shape[0]
        TB = gi_ref.shape[0]

        def body(i, h):
            # within-chunk time index: i for fwd, TB-1-i for bwd
            t = i + d * (TB - 1 - 2 * i)
            gi = gi_ref[t].astype(jnp.float32)                      # (Bp, 3Hp)
            gh = jnp.dot(h.astype(jnp.bfloat16), whh,               # bf16 MXU matmul
                         preferred_element_type=jnp.float32)        # (Bp, 3Hp) f32
            r = jax.nn.sigmoid(gi[:, :Hp] + gh[:, :Hp])
            z = jax.nn.sigmoid(gi[:, Hp:2 * Hp] + gh[:, Hp:2 * Hp])
            n = jnp.tanh(gi[:, 2 * Hp:] + r * (gh[:, 2 * Hp:] + bhn))
            h = (1.0 - z) * n + z * h
            out_ref[t] = h
            return h

        h_s[...] = lax.fori_loop(0, TB, body, h_s[...], unroll=unroll)

    return kernel


def _pick_chunk(T, Bp, Hp, budget_bytes):
    """Largest divisor of T whose double-buffered pipeline footprint fits the budget."""
    fixed = 2 * (Hp * 3 * Hp * 2) + 2 * (2 * Hp * 4) + Bp * Hp * 4      # weights + carry
    per_step = 2 * Bp * (3 * Hp * 2 + Hp * 4)                           # gi (bf16) + out (f32), x2 bufs
    tb = int(max(1, min(T, (budget_bytes - fixed) // per_step)))
    while T % tb:                                                        # NOTE: prime T degrades to tb=1
        tb -= 1
    return tb, fixed + tb * per_step


def encoder_forward(src, params, hidden_size, *, vmem_budget=40 * 1024 * 1024, max_unroll=8):
    """src: (T, B, D) float32. Returns (outputs (T,B,H), hidden (2,B,H))."""
    T, B, D = src.shape
    H = hidden_size
    Hp = params["whh"].shape[0]          # lane-padded hidden size (multiple of 128)
    G = 3 * Hp

    Bp = _round_up(B, 16)                # sublane padding (16: bf16 gi packing)
    src_p = jnp.pad(src, ((0, 0), (0, Bp - B), (0, 0))) if Bp != B else src

    TB, needed = _pick_chunk(T, Bp, Hp, vmem_budget)
    C = T // TB
    vmem_limit = int(min(max(2 * needed, 32 * 1024 * 1024), 48 * 1024 * 1024))

    # ---- fused input projection: one (T*Bp, D) @ (D, 6Hp) MXU matmul for both dirs ----
    x2d = src_p.reshape(T * Bp, D).astype(jnp.bfloat16)
    gi = (jnp.dot(x2d, params["wih"], preferred_element_type=jnp.float32)
          + params["bi"]).astype(jnp.bfloat16).reshape(T, Bp, 2 * G)

    def blk_map(d, c):
        # time block: c for fwd (d=0), C-1-c for bwd (d=1); lane block selects direction
        return (c + d * (C - 1 - 2 * c), 0, d)

    out = pl.pallas_call(
        _make_gru_kernel(min(TB, max_unroll)),
        out_shape=jax.ShapeDtypeStruct((T, Bp, 2 * Hp), jnp.float32),
        grid_spec=pltpu.PrefetchScalarGridSpec(
            num_scalar_prefetch=0,
            grid=(2, C),
            in_specs=[
                pl.BlockSpec((TB, Bp, G), blk_map),                 # gi chunk (per direction)
                pl.BlockSpec((Hp, G), lambda d, c: (0, d)),         # W_hh (per direction)
                pl.BlockSpec((1, Hp), lambda d, c: (0, d)),         # b_hh_n (per direction)
            ],
            out_specs=pl.BlockSpec((TB, Bp, Hp), blk_map),          # hidden states
            scratch_shapes=[pltpu.VMEM((Bp, Hp), jnp.float32)],     # per-core h carry
        ),
        compiler_params=pltpu.CompilerParams(
            dimension_semantics=("parallel", "arbitrary"),          # dirs split across TCs on v7x
            vmem_limit_bytes=vmem_limit,
        ),
    )(gi, params["whh"], params["bhn"])

    # TODO(synk): fwd+bwd sum epilogue left to XLA; for very large T*B*H a lane-dense
    # aliased elementwise Pallas kernel would save one HBM buffer/write.
    out_f = out[:, :B, :H]
    out_b = out[:, :B, Hp:Hp + H]
    outputs = out_f + out_b
    hidden = jnp.stack([out_f[T - 1], out_b[0]], axis=0)            # (2, B, H), PyTorch layout
    return outputs, hidden


def init_params(key, input_dim, hidden_size):
    """PyTorch nn.GRU init: U(-1/sqrt(H), 1/sqrt(H)); gate order (r, z, n).

    Returns (kernel_params, raw_torch_layout) — the latter drives the reference.
    Kernel params are lane-padded (H -> Hp multiple of 128), gates [r|z|n], and the
    two directions are packed along lanes: [fwd 3Hp | bwd 3Hp].
    """
    H = hidden_size
    Hp = _round_up(H, 128)
    k = 1.0 / math.sqrt(H)
    keys = jax.random.split(key, 8)
    u = lambda kk, shape: jax.random.uniform(kk, shape, jnp.float32, -k, k)

    raw = {}
    for tag, ks in zip(("f", "b"), (keys[:4], keys[4:])):
        raw[f"w_ih_{tag}"] = u(ks[0], (3 * H, input_dim))   # torch weight_ih layout
        raw[f"w_hh_{tag}"] = u(ks[1], (3 * H, H))           # torch weight_hh layout
        raw[f"b_ih_{tag}"] = u(ks[2], (3 * H,))
        raw[f"b_hh_{tag}"] = u(ks[3], (3 * H,))

    def pad_gates(w, rows_to):
        # w: (rows, 3H) cols [r|z|n] -> (rows_to, 3Hp), each gate zero-padded to Hp lanes
        rows = w.shape[0]
        out = jnp.zeros((rows_to, 3 * Hp), w.dtype)
        for g in range(3):
            out = out.at[:rows, g * Hp:g * Hp + H].set(w[:, g * H:(g + 1) * H])
        return out

    wih_parts, whh_parts, bi_parts, bhn_parts = [], [], [], []
    for tag in ("f", "b"):
        w_ih = raw[f"w_ih_{tag}"].T                         # (D, 3H)
        w_hh = raw[f"w_hh_{tag}"].T                         # (H, 3H)
        b_ih, b_hh = raw[f"b_ih_{tag}"], raw[f"b_hh_{tag}"]
        wih_parts.append(pad_gates(w_ih, input_dim))        # (D, 3Hp)
        whh_parts.append(pad_gates(w_hh, Hp))               # (Hp, 3Hp)
        # Pre-fold biases: r and z take b_ih + b_hh, n takes only b_ih here;
        # b_hh_n stays separate because it is scaled by r inside the cell.
        bi = jnp.concatenate([
            b_ih[:H] + b_hh[:H],
            b_ih[H:2 * H] + b_hh[H:2 * H],
            b_ih[2 * H:],
        ])
        bi_parts.append(pad_gates(bi[None, :], 1)[0])       # (3Hp,)
        bhn_parts.append(jnp.zeros((Hp,), jnp.float32).at[:H].set(b_hh[2 * H:]))

    params = {
        "wih": jnp.concatenate(wih_parts, axis=1).astype(jnp.bfloat16),   # (D, 6Hp)
        "whh": jnp.concatenate(whh_parts, axis=1).astype(jnp.bfloat16),   # (Hp, 6Hp)
        "bi": jnp.concatenate(bi_parts, axis=0),                          # (6Hp,) f32
        "bhn": jnp.stack(bhn_parts, axis=0).reshape(1, 2 * Hp),           # (1, 2Hp) f32
    }
    return params, raw


def _reference_forward(src, raw, hidden_size):
    """Pure-JAX lax.scan reference mirroring torch.nn.GRU(bidirectional=True)."""
    H = hidden_size

    def cell(x, h, w_ih, w_hh, b_ih, b_hh):
        gi = x @ w_ih.T + b_ih
        gh = h @ w_hh.T + b_hh
        r = jax.nn.sigmoid(gi[:, :H] + gh[:, :H])
        z = jax.nn.sigmoid(gi[:, H:2 * H] + gh[:, H:2 * H])
        n = jnp.tanh(gi[:, 2 * H:] + r * gh[:, 2 * H:])
        return (1.0 - z) * n + z * h

    B = src.shape[1]
    h0 = jnp.zeros((B, H), jnp.float32)

    def run(tag, xs):
        def step(h, x):
            h = cell(x, h, raw[f"w_ih_{tag}"], raw[f"w_hh_{tag}"],
                     raw[f"b_ih_{tag}"], raw[f"b_hh_{tag}"])
            return h, h
        return lax.scan(step, h0, xs)

    hf, out_f = run("f", src)
    hb, out_b_rev = run("b", src[::-1])
    out_b = out_b_rev[::-1]
    return out_f + out_b, jnp.stack([hf, hb], axis=0)


if __name__ == "__main__":
    SEQ, BATCH, INPUT_DIM, HIDDEN = 8, 4, 16, 32

    key = jax.random.PRNGKey(0)
    k_x, k_p = jax.random.split(key)
    src = jax.random.normal(k_x, (SEQ, BATCH, INPUT_DIM), jnp.float32)
    params, raw = init_params(k_p, INPUT_DIM, HIDDEN)

    fwd = jax.jit(functools.partial(encoder_forward, hidden_size=HIDDEN))
    outputs, hidden = fwd(src, params)
    jax.block_until_ready((outputs, hidden))

    ref_out, ref_hid = _reference_forward(src, raw, HIDDEN)
    # bf16 MXU path -> loosened tolerance (recurrent bf16 error compounds over T)
    np.testing.assert_allclose(np.asarray(outputs), np.asarray(ref_out),
                               rtol=3e-2, atol=3e-2)
    np.testing.assert_allclose(np.asarray(hidden), np.asarray(ref_hid),
                               rtol=3e-2, atol=3e-2)

    assert outputs.shape == (SEQ, BATCH, HIDDEN)
    assert hidden.shape == (2, BATCH, HIDDEN)
    print("KERNEL_OK")
</pallas_src>

<mosaic_0001>
module attributes {stable_mosaic.version = 11 : i64} {
  func.func @kernel(%arg0: i32, %arg1: i32, %arg2: memref<8x16x384xbf16, #tpu.memory_space<vmem>>, %arg3: memref<128x384xbf16, #tpu.memory_space<vmem>>, %arg4: memref<1x128xf32, #tpu.memory_space<vmem>>, %arg5: memref<8x16x128xf32, #tpu.memory_space<vmem>>, %arg6: memref<16x128xf32, #tpu.memory_space<vmem>>) attributes {dimension_semantics = [#tpu.dimension_semantics<parallel>, #tpu.dimension_semantics<arbitrary>], iteration_bounds = array<i64: 2, 1>, scalar_prefetch = 0 : i64, scratch_operands = 1 : i64, tpu.core_type = #tpu.core_type<tc>, window_params = [{transform_indices = @transform_0, window_bounds = array<i64: 8, 16, 384>}, {transform_indices = @transform_1, window_bounds = array<i64: 128, 384>}, {transform_indices = @transform_2, window_bounds = array<i64: 1, 128>}, {transform_indices = @transform_3, window_bounds = array<i64: 8, 16, 128>}]} {
    %c0_i32 = arith.constant 0 : i32
    %0 = arith.cmpi eq, %arg1, %c0_i32 : i32
    %1 = arith.extui %0 : i1 to i32
    %c0_i32_0 = arith.constant 0 : i32
    %2 = arith.cmpi ne, %1, %c0_i32_0 : i32
    scf.if %2 {
      %cst_88 = arith.constant 0.000000e+00 : f32
      %343 = vector.broadcast %cst_88 : f32 to vector<16x128xf32>
      %c0_89 = arith.constant 0 : index
      %c0_90 = arith.constant 0 : index
      %344 = vector.load %arg6[%c0_89, %c0_90] : memref<16x128xf32, #tpu.memory_space<vmem>>, vector<16x128xf32>
      tpu.vector_store %arg6[%c0_89, %c0_90], %343 {strides = array<i32>} : memref<16x128xf32, #tpu.memory_space<vmem>>, vector<16x128xf32>,
    } else {
    }
    %c0 = arith.constant 0 : index
    %c0_1 = arith.constant 0 : index
    %3 = vector.load %arg3[%c0, %c0_1] : memref<128x384xbf16, #tpu.memory_space<vmem>>, vector<128x384xbf16>
    %c0_2 = arith.constant 0 : index
    %c0_3 = arith.constant 0 : index
    %4 = vector.load %arg4[%c0_2, %c0_3] : memref<1x128xf32, #tpu.memory_space<vmem>>, vector<1x128xf32>
    %c0_4 = arith.constant 0 : index
    %c0_5 = arith.constant 0 : index
    %5 = vector.load %arg6[%c0_4, %c0_5] : memref<16x128xf32, #tpu.memory_space<vmem>>, vector<16x128xf32>
    %c0_i32_6 = arith.constant 0 : i32
    %c2_i32 = arith.constant 2 : i32
    %6 = arith.muli %c2_i32, %c0_i32_6 : i32
    %c7_i32 = arith.constant 7 : i32
    %7 = arith.subi %c7_i32, %6 : i32
    %8 = arith.muli %arg0, %7 : i32
    %9 = arith.addi %c0_i32_6, %8 : i32
    %10 = arith.index_cast %9 : i32 to index
    %c0_7 = arith.constant 0 : index
    %c0_8 = arith.constant 0 : index
    %11 = vector.load %arg2[%10, %c0_7, %c0_8] : memref<8x16x384xbf16, #tpu.memory_space<vmem>>, vector<1x16x384xbf16>
    %12 = vector.shape_cast %11 : vector<1x16x384xbf16> to vector<16x384xbf16>
    %13 = arith.extf %12 : vector<16x384xbf16> to vector<16x384xf32>
    %14 = arith.truncf %5 : vector<16x128xf32> to vector<16x128xbf16>
    %cst = arith.constant dense<0.000000e+00> : vector<16x384xf32>
    %15 = tpu.matmul %14, %3, %cst {dimension_numbers = #tpu.dot_dimension_numbers<[1], [0], [0], [1], [0, 0, 1, 1], [], []>} : vector<16x128xbf16>, vector<128x384xbf16>, vector<16x384xf32> -> vector<16x384xf32>
    %16 = vector.extract_strided_slice %13 {offsets = [0, 0], sizes = [16, 128], strides = [1, 1]} : vector<16x384xf32> to vector<16x128xf32>
    %17 = vector.extract_strided_slice %15 {offsets = [0, 0], sizes = [16, 128], strides = [1, 1]} : vector<16x384xf32> to vector<16x128xf32>
    %18 = arith.addf %16, %17 : vector<16x128xf32>
    %19 = arith.negf %18 : vector<16x128xf32>
    %20 = math.exp %19 : vector<16x128xf32>
    %cst_9 = arith.constant 1.000000e+00 : f32
    %21 = vector.broadcast %cst_9 : f32 to vector<16x128xf32>
    %22 = arith.addf %21, %20 : vector<16x128xf32>
    %23 = arith.divf %21, %22 : vector<16x128xf32>
    %24 = vector.extract_strided_slice %13 {offsets = [0, 128], sizes = [16, 128], strides = [1, 1]} : vector<16x384xf32> to vector<16x128xf32>
    %25 = vector.extract_strided_slice %15 {offsets = [0, 128], sizes = [16, 128], strides = [1, 1]} : vector<16x384xf32> to vector<16x128xf32>
    %26 = arith.addf %24, %25 : vector<16x128xf32>
    %27 = arith.negf %26 : vector<16x128xf32>
    %28 = math.exp %27 : vector<16x128xf32>
    %cst_10 = arith.constant 1.000000e+00 : f32
    %29 = vector.broadcast %cst_10 : f32 to vector<16x128xf32>
    %30 = arith.addf %29, %28 : vector<16x128xf32>
    %31 = arith.divf %29, %30 : vector<16x128xf32>
    %32 = vector.extract_strided_slice %13 {offsets = [0, 256], sizes = [16, 128], strides = [1, 1]} : vector<16x384xf32> to vector<16x128xf32>
    %33 = vector.extract_strided_slice %15 {offsets = [0, 256], sizes = [16, 128], strides = [1, 1]} : vector<16x384xf32> to vector<16x128xf32>
    %34 = vector.broadcast %4 : vector<1x128xf32> to vector<16x128xf32>
    %35 = arith.addf %33, %34 : vector<16x128xf32>
    %36 = arith.mulf %23, %35 : vector<16x128xf32>
    %37 = arith.addf %32, %36 : vector<16x128xf32>
    %38 = math.tanh %37 : vector<16x128xf32>
    %cst_11 = arith.constant 1.000000e+00 : f32
    %39 = vector.broadcast %cst_11 : f32 to vector<16x128xf32>
    %40 = arith.subf %39, %31 : vector<16x128xf32>
    %41 = arith.mulf %40, %38 : vector<16x128xf32>
    %42 = arith.mulf %31, %5 : vector<16x128xf32>
    %43 = arith.addf %41, %42 : vector<16x128xf32>
    %44 = arith.index_cast %9 : i32 to index
    %c0_12 = arith.constant 0 : index
    %c0_13 = arith.constant 0 : index
    %45 = vector.load %arg5[%44, %c0_12, %c0_13] : memref<8x16x128xf32, #tpu.memory_space<vmem>>, vector<1x16x128xf32>
    %46 = vector.shape_cast %45 : vector<1x16x128xf32> to vector<16x128xf32>
    %47 = vector.shape_cast %43 : vector<16x128xf32> to vector<1x16x128xf32>
    tpu.vector_store %arg5[%44, %c0_12, %c0_13], %47 {strides = array<i32>} : memref<8x16x128xf32, #tpu.memory_space<vmem>>, vector<1x16x128xf32>,
    %c1_i32 = arith.constant 1 : i32
    %c2_i32_14 = arith.constant 2 : i32
    %48 = arith.muli %c2_i32_14, %c1_i32 : i32
    %c7_i32_15 = arith.constant 7 : i32
    %49 = arith.subi %c7_i32_15, %48 : i32
    %50 = arith.muli %arg0, %49 : i32
    %51 = arith.addi %c1_i32, %50 : i32
    %52 = arith.index_cast %51 : i32 to index
    %c0_16 = arith.constant 0 : index
    %c0_17 = arith.constant 0 : index
    %53 = vector.load %arg2[%52, %c0_16, %c0_17] : memref<8x16x384xbf16, #tpu.memory_space<vmem>>, vector<1x16x384xbf16>
    %54 = vector.shape_cast %53 : vector<1x16x384xbf16> to vector<16x384xbf16>
    %55 = arith.extf %54 : vector<16x384xbf16> to vector<16x384xf32>
    %56 = arith.truncf %43 : vector<16x128xf32> to vector<16x128xbf16>
    %cst_18 = arith.constant dense<0.000000e+00> : vector<16x384xf32>
    %57 = tpu.matmul %56, %3, %cst_18 {dimension_numbers = #tpu.dot_dimension_numbers<[1], [0], [0], [1], [0, 0, 1, 1], [], []>} : vector<16x128xbf16>, vector<128x384xbf16>, vector<16x384xf32> -> vector<16x384xf32>
    %58 = vector.extract_strided_slice %55 {offsets = [0, 0], sizes = [16, 128], strides = [1, 1]} : vector<16x384xf32> to vector<16x128xf32>
    %59 = vector.extract_strided_slice %57 {offsets = [0, 0], sizes = [16, 128], strides = [1, 1]} : vector<16x384xf32> to vector<16x128xf32>
    %60 = arith.addf %58, %59 : vector<16x128xf32>
    %61 = arith.negf %60 : vector<16x128xf32>
    %62 = math.exp %61 : vector<16x128xf32>
    %cst_19 = arith.constant 1.000000e+00 : f32
    %63 = vector.broadcast %cst_19 : f32 to vector<16x128xf32>
    %64 = arith.addf %63, %62 : vector<16x128xf32>
    %65 = arith.divf %63, %64 : vector<16x128xf32>
    %66 = vector.extract_strided_slice %55 {offsets = [0, 128], sizes = [16, 128], strides = [1, 1]} : vector<16x384xf32> to vector<16x128xf32>
    %67 = vector.extract_strided_slice %57 {offsets = [0, 128], sizes = [16, 128], strides = [1, 1]} : vector<16x384xf32> to vector<16x128xf32>
    %68 = arith.addf %66, %67 : vector<16x128xf32>
    %69 = arith.negf %68 : vector<16x128xf32>
    %70 = math.exp %69 : vector<16x128xf32>
    %cst_20 = arith.constant 1.000000e+00 : f32
    %71 = vector.broadcast %cst_20 : f32 to vector<16x128xf32>
    %72 = arith.addf %71, %70 : vector<16x128xf32>
    %73 = arith.divf %71, %72 : vector<16x128xf32>
    %74 = vector.extract_strided_slice %55 {offsets = [0, 256], sizes = [16, 128], strides = [1, 1]} : vector<16x384xf32> to vector<16x128xf32>
    %75 = vector.extract_strided_slice %57 {offsets = [0, 256], sizes = [16, 128], strides = [1, 1]} : vector<16x384xf32> to vector<16x128xf32>
    %76 = vector.broadcast %4 : vector<1x128xf32> to vector<16x128xf32>
    %77 = arith.addf %75, %76 : vector<16x128xf32>
    %78 = arith.mulf %65, %77 : vector<16x128xf32>
    %79 = arith.addf %74, %78 : vector<16x128xf32>
    %80 = math.tanh %79 : vector<16x128xf32>
    %cst_21 = arith.constant 1.000000e+00 : f32
    %81 = vector.broadcast %cst_21 : f32 to vector<16x128xf32>
    %82 = arith.subf %81, %73 : vector<16x128xf32>
    %83 = arith.mulf %82, %80 : vector<16x128xf32>
    %84 = arith.mulf %73, %43 : vector<16x128xf32>
    %85 = arith.addf %83, %84 : vector<16x128xf32>
    %86 = arith.index_cast %51 : i32 to index
    %c0_22 = arith.constant 0 : index
    %c0_23 = arith.constant 0 : index
    %87 = vector.load %arg5[%86, %c0_22, %c0_23] : memref<8x16x128xf32, #tpu.memory_space<vmem>>, vector<1x16x128xf32>
    %88 = vector.shape_cast %87 : vector<1x16x128xf32> to vector<16x128xf32>
    %89 = vector.shape_cast %85 : vector<16x128xf32> to vector<1x16x128xf32>
    tpu.vector_store %arg5[%86, %c0_22, %c0_23], %89 {strides = array<i32>} : memref<8x16x128xf32, #tpu.memory_space<vmem>>, vector<1x16x128xf32>,
    %c2_i32_24 = arith.constant 2 : i32
    %c2_i32_25 = arith.constant 2 : i32
    %90 = arith.muli %c2_i32_25, %c2_i32_24 : i32
    %c7_i32_26 = arith.constant 7 : i32
    %91 = arith.subi %c7_i32_26, %90 : i32
    %92 = arith.muli %arg0, %91 : i32
    %93 = arith.addi %c2_i32_24, %92 : i32
    %94 = arith.index_cast %93 : i32 to index
    %c0_27 = arith.constant 0 : index
    %c0_28 = arith.constant 0 : index
    %95 = vector.load %arg2[%94, %c0_27, %c0_28] : memref<8x16x384xbf16, #tpu.memory_space<vmem>>, vector<1x16x384xbf16>
    %96 = vector.shape_cast %95 : vector<1x16x384xbf16> to vector<16x384xbf16>
    %97 = arith.extf %96 : vector<16x384xbf16> to vector<16x384xf32>
    %98 = arith.truncf %85 : vector<16x128xf32> to vector<16x128xbf16>
    %cst_29 = arith.constant dense<0.000000e+00> : vector<16x384xf32>
    %99 = tpu.matmul %98, %3, %cst_29 {dimension_numbers = #tpu.dot_dimension_numbers<[1], [0], [0], [1], [0, 0, 1, 1], [], []>} : vector<16x128xbf16>, vector<128x384xbf16>, vector<16x384xf32> -> vector<16x384xf32>
    %100 = vector.extract_strided_slice %97 {offsets = [0, 0], sizes = [16, 128], strides = [1, 1]} : vector<16x384xf32> to vector<16x128xf32>
    %101 = vector.extract_strided_slice %99 {offsets = [0, 0], sizes = [16, 128], strides = [1, 1]} : vector<16x384xf32> to vector<16x128xf32>
    %102 = arith.addf %100, %101 : vector<16x128xf32>
    %103 = arith.negf %102 : vector<16x128xf32>
    %104 = math.exp %103 : vector<16x128xf32>
    %cst_30 = arith.constant 1.000000e+00 : f32
    %105 = vector.broadcast %cst_30 : f32 to vector<16x128xf32>
    %106 = arith.addf %105, %104 : vector<16x128xf32>
    %107 = arith.divf %105, %106 : vector<16x128xf32>
    %108 = vector.extract_strided_slice %97 {offsets = [0, 128], sizes = [16, 128], strides = [1, 1]} : vector<16x384xf32> to vector<16x128xf32>
    %109 = vector.extract_strided_slice %99 {offsets = [0, 128], sizes = [16, 128], strides = [1, 1]} : vector<16x384xf32> to vector<16x128xf32>
    %110 = arith.addf %108, %109 : vector<16x128xf32>
    %111 = arith.negf %110 : vector<16x128xf32>
    %112 = math.exp %111 : vector<16x128xf32>
    %cst_31 = arith.constant 1.000000e+00 : f32
    %113 = vector.broadcast %cst_31 : f32 to vector<16x128xf32>
    %114 = arith.addf %113, %112 : vector<16x128xf32>
    %115 = arith.divf %113, %114 : vector<16x128xf32>
    %116 = vector.extract_strided_slice %97 {offsets = [0, 256], sizes = [16, 128], strides = [1, 1]} : vector<16x384xf32> to vector<16x128xf32>
    %117 = vector.extract_strided_slice %99 {offsets = [0, 256], sizes = [16, 128], strides = [1, 1]} : vector<16x384xf32> to vector<16x128xf32>
    %118 = vector.broadcast %4 : vector<1x128xf32> to vector<16x128xf32>
    %119 = arith.addf %117, %118 : vector<16x128xf32>
    %120 = arith.mulf %107, %119 : vector<16x128xf32>
    %121 = arith.addf %116, %120 : vector<16x128xf32>
    %122 = math.tanh %121 : vector<16x128xf32>
    %cst_32 = arith.constant 1.000000e+00 : f32
    %123 = vector.broadcast %cst_32 : f32 to vector<16x128xf32>
    %124 = arith.subf %123, %115 : vector<16x128xf32>
    %125 = arith.mulf %124, %122 : vector<16x128xf32>
    %126 = arith.mulf %115, %85 : vector<16x128xf32>
    %127 = arith.addf %125, %126 : vector<16x128xf32>
    %128 = arith.index_cast %93 : i32 to index
    %c0_33 = arith.constant 0 : index
    %c0_34 = arith.constant 0 : index
    %129 = vector.load %arg5[%128, %c0_33, %c0_34] : memref<8x16x128xf32, #tpu.memory_space<vmem>>, vector<1x16x128xf32>
    %130 = vector.shape_cast %129 : vector<1x16x128xf32> to vector<16x128xf32>
    %131 = vector.shape_cast %127 : vector<16x128xf32> to vector<1x16x128xf32>
    tpu.vector_store %arg5[%128, %c0_33, %c0_34], %131 {strides = array<i32>} : memref<8x16x128xf32, #tpu.memory_space<vmem>>, vector<1x16x128xf32>,
    %c3_i32 = arith.constant 3 : i32
    %c2_i32_35 = arith.constant 2 : i32
    %132 = arith.muli %c2_i32_35, %c3_i32 : i32
    %c7_i32_36 = arith.constant 7 : i32
    %133 = arith.subi %c7_i32_36, %132 : i32
    %134 = arith.muli %arg0, %133 : i32
    %135 = arith.addi %c3_i32, %134 : i32
    %136 = arith.index_cast %135 : i32 to index
    %c0_37 = arith.constant 0 : index
    %c0_38 = arith.constant 0 : index
    %137 = vector.load %arg2[%136, %c0_37, %c0_38] : memref<8x16x384xbf16, #tpu.memory_space<vmem>>, vector<1x16x384xbf16>
    %138 = vector.shape_cast %137 : vector<1x16x384xbf16> to vector<16x384xbf16>
    %139 = arith.extf %138 : vector<16x384xbf16> to vector<16x384xf32>
    %140 = arith.truncf %127 : vector<16x128xf32> to vector<16x128xbf16>
    %cst_39 = arith.constant dense<0.000000e+00> : vector<16x384xf32>
    %141 = tpu.matmul %140, %3, %cst_39 {dimension_numbers = #tpu.dot_dimension_numbers<[1], [0], [0], [1], [0, 0, 1, 1], [], []>} : vector<16x128xbf16>, vector<128x384xbf16>, vector<16x384xf32> -> vector<16x384xf32>
    %142 = vector.extract_strided_slice %139 {offsets = [0, 0], sizes = [16, 128], strides = [1, 1]} : vector<16x384xf32> to vector<16x128xf32>
    %143 = vector.extract_strided_slice %141 {offsets = [0, 0], sizes = [16, 128], strides = [1, 1]} : vector<16x384xf32> to vector<16x128xf32>
    %144 = arith.addf %142, %143 : vector<16x128xf32>
    %145 = arith.negf %144 : vector<16x128xf32>
    %146 = math.exp %145 : vector<16x128xf32>
    %cst_40 = arith.constant 1.000000e+00 : f32
    %147 = vector.broadcast %cst_40 : f32 to vector<16x128xf32>
    %148 = arith.addf %147, %146 : vector<16x128xf32>
    %149 = arith.divf %147, %148 : vector<16x128xf32>
    %150 = vector.extract_strided_slice %139 {offsets = [0, 128], sizes = [16, 128], strides = [1, 1]} : vector<16x384xf32> to vector<16x128xf32>
    %151 = vector.extract_strided_slice %141 {offsets = [0, 128], sizes = [16, 128], strides = [1, 1]} : vector<16x384xf32> to vector<16x128xf32>
    %152 = arith.addf %150, %151 : vector<16x128xf32>
    %153 = arith.negf %152 : vector<16x128xf32>
    %154 = math.exp %153 : vector<16x128xf32>
    %cst_41 = arith.constant 1.000000e+00 : f32
    %155 = vector.broadcast %cst_41 : f32 to vector<16x128xf32>
    %156 = arith.addf %155, %154 : vector<16x128xf32>
    %157 = arith.divf %155, %156 : vector<16x128xf32>
    %158 = vector.extract_strided_slice %139 {offsets = [0, 256], sizes = [16, 128], strides = [1, 1]} : vector<16x384xf32> to vector<16x128xf32>
    %159 = vector.extract_strided_slice %141 {offsets = [0, 256], sizes = [16, 128], strides = [1, 1]} : vector<16x384xf32> to vector<16x128xf32>
    %160 = vector.broadcast %4 : vector<1x128xf32> to vector<16x128xf32>
    %161 = arith.addf %159, %160 : vector<16x128xf32>
    %162 = arith.mulf %149, %161 : vector<16x128xf32>
    %163 = arith.addf %158, %162 : vector<16x128xf32>
    %164 = math.tanh %163 : vector<16x128xf32>
    %cst_42 = arith.constant 1.000000e+00 : f32
    %165 = vector.broadcast %cst_42 : f32 to vector<16x128xf32>
    %166 = arith.subf %165, %157 : vector<16x128xf32>
    %167 = arith.mulf %166, %164 : vector<16x128xf32>
    %168 = arith.mulf %157, %127 : vector<16x128xf32>
    %169 = arith.addf %167, %168 : vector<16x128xf32>
    %170 = arith.index_cast %135 : i32 to index
    %c0_43 = arith.constant 0 : index
    %c0_44 = arith.constant 0 : index
    %171 = vector.load %arg5[%170, %c0_43, %c0_44] : memref<8x16x128xf32, #tpu.memory_space<vmem>>, vector<1x16x128xf32>
    %172 = vector.shape_cast %171 : vector<1x16x128xf32> to vector<16x128xf32>
    %173 = vector.shape_cast %169 : vector<16x128xf32> to vector<1x16x128xf32>
    tpu.vector_store %arg5[%170, %c0_43, %c0_44], %173 {strides = array<i32>} : memref<8x16x128xf32, #tpu.memory_space<vmem>>, vector<1x16x128xf32>,
    %c4_i32 = arith.constant 4 : i32
    %c2_i32_45 = arith.constant 2 : i32
    %174 = arith.muli %c2_i32_45, %c4_i32 : i32
    %c7_i32_46 = arith.constant 7 : i32
    %175 = arith.subi %c7_i32_46, %174 : i32
    %176 = arith.muli %arg0, %175 : i32
    %177 = arith.addi %c4_i32, %176 : i32
    %178 = arith.index_cast %177 : i32 to index
    %c0_47 = arith.constant 0 : index
    %c0_48 = arith.constant 0 : index
    %179 = vector.load %arg2[%178, %c0_47, %c0_48] : memref<8x16x384xbf16, #tpu.memory_space<vmem>>, vector<1x16x384xbf16>
    %180 = vector.shape_cast %179 : vector<1x16x384xbf16> to vector<16x384xbf16>
    %181 = arith.extf %180 : vector<16x384xbf16> to vector<16x384xf32>
    %182 = arith.truncf %169 : vector<16x128xf32> to vector<16x128xbf16>
    %cst_49 = arith.constant dense<0.000000e+00> : vector<16x384xf32>
    %183 = tpu.matmul %182, %3, %cst_49 {dimension_numbers = #tpu.dot_dimension_numbers<[1], [0], [0], [1], [0, 0, 1, 1], [], []>} : vector<16x128xbf16>, vector<128x384xbf16>, vector<16x384xf32> -> vector<16x384xf32>
    %184 = vector.extract_strided_slice %181 {offsets = [0, 0], sizes = [16, 128], strides = [1, 1]} : vector<16x384xf32> to vector<16x128xf32>
    %185 = vector.extract_strided_slice %183 {offsets = [0, 0], sizes = [16, 128], strides = [1, 1]} : vector<16x384xf32> to vector<16x128xf32>
    %186 = arith.addf %184, %185 : vector<16x128xf32>
    %187 = arith.negf %186 : vector<16x128xf32>
    %188 = math.exp %187 : vector<16x128xf32>
    %cst_50 = arith.constant 1.000000e+00 : f32
    %189 = vector.broadcast %cst_50 : f32 to vector<16x128xf32>
    %190 = arith.addf %189, %188 : vector<16x128xf32>
    %191 = arith.divf %189, %190 : vector<16x128xf32>
    %192 = vector.extract_strided_slice %181 {offsets = [0, 128], sizes = [16, 128], strides = [1, 1]} : vector<16x384xf32> to vector<16x128xf32>
    %193 = vector.extract_strided_slice %183 {offsets = [0, 128], sizes = [16, 128], strides = [1, 1]} : vector<16x384xf32> to vector<16x128xf32>
    %194 = arith.addf %192, %193 : vector<16x128xf32>
    %195 = arith.negf %194 : vector<16x128xf32>
    %196 = math.exp %195 : vector<16x128xf32>
    %cst_51 = arith.constant 1.000000e+00 : f32
    %197 = vector.broadcast %cst_51 : f32 to vector<16x128xf32>
    %198 = arith.addf %197, %196 : vector<16x128xf32>
    %199 = arith.divf %197, %198 : vector<16x128xf32>
    %200 = vector.extract_strided_slice %181 {offsets = [0, 256], sizes = [16, 128], strides = [1, 1]} : vector<16x384xf32> to vector<16x128xf32>
    %201 = vector.extract_strided_slice %183 {offsets = [0, 256], sizes = [16, 128], strides = [1, 1]} : vector<16x384xf32> to vector<16x128xf32>
    %202 = vector.broadcast %4 : vector<1x128xf32> to vector<16x128xf32>
    %203 = arith.addf %201, %202 : vector<16x128xf32>
    %204 = arith.mulf %191, %203 : vector<16x128xf32>
    %205 = arith.addf %200, %204 : vector<16x128xf32>
    %206 = math.tanh %205 : vector<16x128xf32>
    %cst_52 = arith.constant 1.000000e+00 : f32
    %207 = vector.broadcast %cst_52 : f32 to vector<16x128xf32>
    %208 = arith.subf %207, %199 : vector<16x128xf32>
    %209 = arith.mulf %208, %206 : vector<16x128xf32>
    %210 = arith.mulf %199, %169 : vector<16x128xf32>
    %211 = arith.addf %209, %210 : vector<16x128xf32>
    %212 = arith.index_cast %177 : i32 to index
    %c0_53 = arith.constant 0 : index
    %c0_54 = arith.constant 0 : index
    %213 = vector.load %arg5[%212, %c0_53, %c0_54] : memref<8x16x128xf32, #tpu.memory_space<vmem>>, vector<1x16x128xf32>
    %214 = vector.shape_cast %213 : vector<1x16x128xf32> to vector<16x128xf32>
    %215 = vector.shape_cast %211 : vector<16x128xf32> to vector<1x16x128xf32>
    tpu.vector_store %arg5[%212, %c0_53, %c0_54], %215 {strides = array<i32>} : memref<8x16x128xf32, #tpu.memory_space<vmem>>, vector<1x16x128xf32>,
    %c5_i32 = arith.constant 5 : i32
    %c2_i32_55 = arith.constant 2 : i32
    %216 = arith.muli %c2_i32_55, %c5_i32 : i32
    %c7_i32_56 = arith.constant 7 : i32
    %217 = arith.subi %c7_i32_56, %216 : i32
    %218 = arith.muli %arg0, %217 : i32
    %219 = arith.addi %c5_i32, %218 : i32
    %220 = arith.index_cast %219 : i32 to index
    %c0_57 = arith.constant 0 : index
    %c0_58 = arith.constant 0 : index
    %221 = vector.load %arg2[%220, %c0_57, %c0_58] : memref<8x16x384xbf16, #tpu.memory_space<vmem>>, vector<1x16x384xbf16>
    %222 = vector.shape_cast %221 : vector<1x16x384xbf16> to vector<16x384xbf16>
    %223 = arith.extf %222 : vector<16x384xbf16> to vector<16x384xf32>
    %224 = arith.truncf %211 : vector<16x128xf32> to vector<16x128xbf16>
    %cst_59 = arith.constant dense<0.000000e+00> : vector<16x384xf32>
    %225 = tpu.matmul %224, %3, %cst_59 {dimension_numbers = #tpu.dot_dimension_numbers<[1], [0], [0], [1], [0, 0, 1, 1], [], []>} : vector<16x128xbf16>, vector<128x384xbf16>, vector<16x384xf32> -> vector<16x384xf32>
    %226 = vector.extract_strided_slice %223 {offsets = [0, 0], sizes = [16, 128], strides = [1, 1]} : vector<16x384xf32> to vector<16x128xf32>
    %227 = vector.extract_strided_slice %225 {offsets = [0, 0], sizes = [16, 128], strides = [1, 1]} : vector<16x384xf32> to vector<16x128xf32>
    %228 = arith.addf %226, %227 : vector<16x128xf32>
    %229 = arith.negf %228 : vector<16x128xf32>
    %230 = math.exp %229 : vector<16x128xf32>
    %cst_60 = arith.constant 1.000000e+00 : f32
    %231 = vector.broadcast %cst_60 : f32 to vector<16x128xf32>
    %232 = arith.addf %231, %230 : vector<16x128xf32>
    %233 = arith.divf %231, %232 : vector<16x128xf32>
    %234 = vector.extract_strided_slice %223 {offsets = [0, 128], sizes = [16, 128], strides = [1, 1]} : vector<16x384xf32> to vector<16x128xf32>
    %235 = vector.extract_strided_slice %225 {offsets = [0, 128], sizes = [16, 128], strides = [1, 1]} : vector<16x384xf32> to vector<16x128xf32>
    %236 = arith.addf %234, %235 : vector<16x128xf32>
    %237 = arith.negf %236 : vector<16x128xf32>
    %238 = math.exp %237 : vector<16x128xf32>
    %cst_61 = arith.constant 1.000000e+00 : f32
    %239 = vector.broadcast %cst_61 : f32 to vector<16x128xf32>
    %240 = arith.addf %239, %238 : vector<16x128xf32>
    %241 = arith.divf %239, %240 : vector<16x128xf32>
    %242 = vector.extract_strided_slice %223 {offsets = [0, 256], sizes = [16, 128], strides = [1, 1]} : vector<16x384xf32> to vector<16x128xf32>
    %243 = vector.extract_strided_slice %225 {offsets = [0, 256], sizes = [16, 128], strides = [1, 1]} : vector<16x384xf32> to vector<16x128xf32>
    %244 = vector.broadcast %4 : vector<1x128xf32> to vector<16x128xf32>
    %245 = arith.addf %243, %244 : vector<16x128xf32>
    %246 = arith.mulf %233, %245 : vector<16x128xf32>
    %247 = arith.addf %242, %246 : vector<16x128xf32>
    %248 = math.tanh %247 : vector<16x128xf32>
    %cst_62 = arith.constant 1.000000e+00 : f32
    %249 = vector.broadcast %cst_62 : f32 to vector<16x128xf32>
    %250 = arith.subf %249, %241 : vector<16x128xf32>
    %251 = arith.mulf %250, %248 : vector<16x128xf32>
    %252 = arith.mulf %241, %211 : vector<16x128xf32>
    %253 = arith.addf %251, %252 : vector<16x128xf32>
    %254 = arith.index_cast %219 : i32 to index
    %c0_63 = arith.constant 0 : index
    %c0_64 = arith.constant 0 : index
    %255 = vector.load %arg5[%254, %c0_63, %c0_64] : memref<8x16x128xf32, #tpu.memory_space<vmem>>, vector<1x16x128xf32>
    %256 = vector.shape_cast %255 : vector<1x16x128xf32> to vector<16x128xf32>
    %257 = vector.shape_cast %253 : vector<16x128xf32> to vector<1x16x128xf32>
    tpu.vector_store %arg5[%254, %c0_63, %c0_64], %257 {strides = array<i32>} : memref<8x16x128xf32, #tpu.memory_space<vmem>>, vector<1x16x128xf32>,
    %c6_i32 = arith.constant 6 : i32
    %c2_i32_65 = arith.constant 2 : i32
    %258 = arith.muli %c2_i32_65, %c6_i32 : i32
    %c7_i32_66 = arith.constant 7 : i32
    %259 = arith.subi %c7_i32_66, %258 : i32
    %260 = arith.muli %arg0, %259 : i32
    %261 = arith.addi %c6_i32, %260 : i32
    %262 = arith.index_cast %261 : i32 to index
    %c0_67 = arith.constant 0 : index
    %c0_68 = arith.constant 0 : index
    %263 = vector.load %arg2[%262, %c0_67, %c0_68] : memref<8x16x384xbf16, #tpu.memory_space<vmem>>, vector<1x16x384xbf16>
    %264 = vector.shape_cast %263 : vector<1x16x384xbf16> to vector<16x384xbf16>
    %265 = arith.extf %264 : vector<16x384xbf16> to vector<16x384xf32>
    %266 = arith.truncf %253 : vector<16x128xf32> to vector<16x128xbf16>
    %cst_69 = arith.constant dense<0.000000e+00> : vector<16x384xf32>
    %267 = tpu.matmul %266, %3, %cst_69 {dimension_numbers = #tpu.dot_dimension_numbers<[1], [0], [0], [1], [0, 0, 1, 1], [], []>} : vector<16x128xbf16>, vector<128x384xbf16>, vector<16x384xf32> -> vector<16x384xf32>
    %268 = vector.extract_strided_slice %265 {offsets = [0, 0], sizes = [16, 128], strides = [1, 1]} : vector<16x384xf32> to vector<16x128xf32>
    %269 = vector.extract_strided_slice %267 {offsets = [0, 0], sizes = [16, 128], strides = [1, 1]} : vector<16x384xf32> to vector<16x128xf32>
    %270 = arith.addf %268, %269 : vector<16x128xf32>
    %271 = arith.negf %270 : vector<16x128xf32>
    %272 = math.exp %271 : vector<16x128xf32>
    %cst_70 = arith.constant 1.000000e+00 : f32
    %273 = vector.broadcast %cst_70 : f32 to vector<16x128xf32>
    %274 = arith.addf %273, %272 : vector<16x128xf32>
    %275 = arith.divf %273, %274 : vector<16x128xf32>
    %276 = vector.extract_strided_slice %265 {offsets = [0, 128], sizes = [16, 128], strides = [1, 1]} : vector<16x384xf32> to vector<16x128xf32>
    %277 = vector.extract_strided_slice %267 {offsets = [0, 128], sizes = [16, 128], strides = [1, 1]} : vector<16x384xf32> to vector<16x128xf32>
    %278 = arith.addf %276, %277 : vector<16x128xf32>
    %279 = arith.negf %278 : vector<16x128xf32>
    %280 = math.exp %279 : vector<16x128xf32>
    %cst_71 = arith.constant 1.000000e+00 : f32
    %281 = vector.broadcast %cst_71 : f32 to vector<16x128xf32>
    %282 = arith.addf %281, %280 : vector<16x128xf32>
    %283 = arith.divf %281, %282 : vector<16x128xf32>
    %284 = vector.extract_strided_slice %265 {offsets = [0, 256], sizes = [16, 128], strides = [1, 1]} : vector<16x384xf32> to vector<16x128xf32>
    %285 = vector.extract_strided_slice %267 {offsets = [0, 256], sizes = [16, 128], strides = [1, 1]} : vector<16x384xf32> to vector<16x128xf32>
    %286 = vector.broadcast %4 : vector<1x128xf32> to vector<16x128xf32>
    %287 = arith.addf %285, %286 : vector<16x128xf32>
    %288 = arith.mulf %275, %287 : vector<16x128xf32>
    %289 = arith.addf %284, %288 : vector<16x128xf32>
    %290 = math.tanh %289 : vector<16x128xf32>
    %cst_72 = arith.constant 1.000000e+00 : f32
    %291 = vector.broadcast %cst_72 : f32 to vector<16x128xf32>
    %292 = arith.subf %291, %283 : vector<16x128xf32>
    %293 = arith.mulf %292, %290 : vector<16x128xf32>
    %294 = arith.mulf %283, %253 : vector<16x128xf32>
    %295 = arith.addf %293, %294 : vector<16x128xf32>
    %296 = arith.index_cast %261 : i32 to index
    %c0_73 = arith.constant 0 : index
    %c0_74 = arith.constant 0 : index
    %297 = vector.load %arg5[%296, %c0_73, %c0_74] : memref<8x16x128xf32, #tpu.memory_space<vmem>>, vector<1x16x128xf32>
    %298 = vector.shape_cast %297 : vector<1x16x128xf32> to vector<16x128xf32>
    %299 = vector.shape_cast %295 : vector<16x128xf32> to vector<1x16x128xf32>
    tpu.vector_store %arg5[%296, %c0_73, %c0_74], %299 {strides = array<i32>} : memref<8x16x128xf32, #tpu.memory_space<vmem>>, vector<1x16x128xf32>,
    %c7_i32_75 = arith.constant 7 : i32
    %c2_i32_76 = arith.constant 2 : i32
    %300 = arith.muli %c2_i32_76, %c7_i32_75 : i32
    %c7_i32_77 = arith.constant 7 : i32
    %301 = arith.subi %c7_i32_77, %300 : i32
    %302 = arith.muli %arg0, %301 : i32
    %303 = arith.addi %c7_i32_75, %302 : i32
    %304 = arith.index_cast %303 : i32 to index
    %c0_78 = arith.constant 0 : index
    %c0_79 = arith.constant 0 : index
    %305 = vector.load %arg2[%304, %c0_78, %c0_79] : memref<8x16x384xbf16, #tpu.memory_space<vmem>>, vector<1x16x384xbf16>
    %306 = vector.shape_cast %305 : vector<1x16x384xbf16> to vector<16x384xbf16>
    %307 = arith.extf %306 : vector<16x384xbf16> to vector<16x384xf32>
    %308 = arith.truncf %295 : vector<16x128xf32> to vector<16x128xbf16>
    %cst_80 = arith.constant dense<0.000000e+00> : vector<16x384xf32>
    %309 = tpu.matmul %308, %3, %cst_80 {dimension_numbers = #tpu.dot_dimension_numbers<[1], [0], [0], [1], [0, 0, 1, 1], [], []>} : vector<16x128xbf16>, vector<128x384xbf16>, vector<16x384xf32> -> vector<16x384xf32>
    %310 = vector.extract_strided_slice %307 {offsets = [0, 0], sizes = [16, 128], strides = [1, 1]} : vector<16x384xf32> to vector<16x128xf32>
    %311 = vector.extract_strided_slice %309 {offsets = [0, 0], sizes = [16, 128], strides = [1, 1]} : vector<16x384xf32> to vector<16x128xf32>
    %312 = arith.addf %310, %311 : vector<16x128xf32>
    %313 = arith.negf %312 : vector<16x128xf32>
    %314 = math.exp %313 : vector<16x128xf32>
    %cst_81 = arith.constant 1.000000e+00 : f32
    %315 = vector.broadcast %cst_81 : f32 to vector<16x128xf32>
    %316 = arith.addf %315, %314 : vector<16x128xf32>
    %317 = arith.divf %315, %316 : vector<16x128xf32>
    %318 = vector.extract_strided_slice %307 {offsets = [0, 128], sizes = [16, 128], strides = [1, 1]} : vector<16x384xf32> to vector<16x128xf32>
    %319 = vector.extract_strided_slice %309 {offsets = [0, 128], sizes = [16, 128], strides = [1, 1]} : vector<16x384xf32> to vector<16x128xf32>
    %320 = arith.addf %318, %319 : vector<16x128xf32>
    %321 = arith.negf %320 : vector<16x128xf32>
    %322 = math.exp %321 : vector<16x128xf32>
    %cst_82 = arith.constant 1.000000e+00 : f32
    %323 = vector.broadcast %cst_82 : f32 to vector<16x128xf32>
    %324 = arith.addf %323, %322 : vector<16x128xf32>
    %325 = arith.divf %323, %324 : vector<16x128xf32>
    %326 = vector.extract_strided_slice %307 {offsets = [0, 256], sizes = [16, 128], strides = [1, 1]} : vector<16x384xf32> to vector<16x128xf32>
    %327 = vector.extract_strided_slice %309 {offsets = [0, 256], sizes = [16, 128], strides = [1, 1]} : vector<16x384xf32> to vector<16x128xf32>
    %328 = vector.broadcast %4 : vector<1x128xf32> to vector<16x128xf32>
    %329 = arith.addf %327, %328 : vector<16x128xf32>
    %330 = arith.mulf %317, %329 : vector<16x128xf32>
    %331 = arith.addf %326, %330 : vector<16x128xf32>
    %332 = math.tanh %331 : vector<16x128xf32>
    %cst_83 = arith.constant 1.000000e+00 : f32
    %333 = vector.broadcast %cst_83 : f32 to vector<16x128xf32>
    %334 = arith.subf %333, %325 : vector<16x128xf32>
    %335 = arith.mulf %334, %332 : vector<16x128xf32>
    %336 = arith.mulf %325, %295 : vector<16x128xf32>
    %337 = arith.addf %335, %336 : vector<16x128xf32>
    %338 = arith.index_cast %303 : i32 to index
    %c0_84 = arith.constant 0 : index
    %c0_85 = arith.constant 0 : index
    %339 = vector.load %arg5[%338, %c0_84, %c0_85] : memref<8x16x128xf32, #tpu.memory_space<vmem>>, vector<1x16x128xf32>
    %340 = vector.shape_cast %339 : vector<1x16x128xf32> to vector<16x128xf32>
    %341 = vector.shape_cast %337 : vector<16x128xf32> to vector<1x16x128xf32>
    tpu.vector_store %arg5[%338, %c0_84, %c0_85], %341 {strides = array<i32>} : memref<8x16x128xf32, #tpu.memory_space<vmem>>, vector<1x16x128xf32>,
    %c8_i32 = arith.constant 8 : i32
    %c0_86 = arith.constant 0 : index
    %c0_87 = arith.constant 0 : index
    %342 = vector.load %arg6[%c0_86, %c0_87] : memref<16x128xf32, #tpu.memory_space<vmem>>, vector<16x128xf32>
    tpu.vector_store %arg6[%c0_86, %c0_87], %337 {strides = array<i32>} : memref<16x128xf32, #tpu.memory_space<vmem>>, vector<16x128xf32>,
    return
  }
  func.func @transform_0(%arg0: i32, %arg1: i32) -> (i32, i32, i32) {
    %c2_i32 = arith.constant 2 : i32
    %0 = arith.muli %c2_i32, %arg1 : i32
    %c0_i32 = arith.constant 0 : i32
    %1 = arith.subi %c0_i32, %0 : i32
    %2 = arith.muli %arg0, %1 : i32
    %3 = arith.addi %arg1, %2 : i32
    %c0_i32_0 = arith.constant 0 : i32
    %c0_i32_1 = arith.constant 0 : i32
    return %3, %c0_i32_0, %arg0 : i32, i32, i32
  }
  func.func @transform_1(%arg0: i32, %arg1: i32) -> (i32, i32) {
    %c0_i32 = arith.constant 0 : i32
    %c0_i32_0 = arith.constant 0 : i32
    return %c0_i32, %arg0 : i32, i32
  }
  func.func @transform_2(%arg0: i32, %arg1: i32) -> (i32, i32) {
    %c0_i32 = arith.constant 0 : i32
    %c0_i32_0 = arith.constant 0 : i32
    return %c0_i32, %arg0 : i32, i32
  }
  func.func @transform_3(%arg0: i32, %arg1: i32) -> (i32, i32, i32) {
    %c2_i32 = arith.constant 2 : i32
    %0 = arith.muli %c2_i32, %arg1 : i32
    %c0_i32 = arith.constant 0 : i32
    %1 = arith.subi %c0_i32, %0 : i32
    %2 = arith.muli %arg0, %1 : i32
    %3 = arith.addi %arg1, %2 : i32
    %c0_i32_0 = arith.constant 0 : i32
    %c0_i32_1 = arith.constant 0 : i32
    return %3, %c0_i32_0, %arg0 : i32, i32, i32
  }
}

</mosaic_0001>

<llo_original>
// kernel: encoder_forward.1
$region0: #{encoder_forward.1}
  #allocation0 [shape = 'u32[]', space=smem, size = 0x4, offset = 0x4, fixed_abs, tag = 'smem constant byte address 0x4 - core index']
  #allocation1 [shape = 'u32[144,128]{1,0:T(1,128)}', space=vmem, size = 0x12000, scoped, tag = 'internal scratch']
  #allocation2 [shape = 'f32[16,128]{1,0:T(8,128)}', space=vmem, size = 0x2000, scoped, tag = 'scratch operand']
  %s0 = inlined_call_operand.vmem [shape: bf16[8,16,768], index: 0, kind: input, shape index: {}]
  %s1 = inlined_call_operand.vmem [shape: bf16[128,768], index: 1, kind: input, shape index: {}]
  %s2 = inlined_call_operand.vmem [shape: f32[1,256], index: 2, kind: input, shape index: {}]
  %s3 = inlined_call_operand.vmem [shape: f32[8,16,256], index: 3, kind: output, shape index: {}]
  %s4 = sld [smem:[#allocation0]]
  $region135: #{encoder_forward.1} parent=0
    _
  %s6 = ssub.s32 1, %s4
  %s7 = scalar_select 0, %s6, %s4
  $region1: #{encoder_forward.1} parent=0
    #allocation3 [shape = 'u8[196608]{0}', space=vmem, size = 0x30000, scoped, tag = 'input window, operand 0']
    #allocation4 [shape = 'u8[196608]{0}', space=vmem, size = 0x30000, scoped, tag = 'input window, operand 1']
    #allocation5 [shape = 'u8[131072]{0}', space=vmem, size = 0x20000, scoped, tag = 'output window, operand 0']
    loop: start=0, step=1, limit=4
    $region2: #{encoder_forward.1} parent=1 // loop_pre_header
      _
    $region3: #{encoder_forward.1} parent=1 // loop_header
      %s9 = sphi 0, %s13
      %p10 = scmp.ge.s32.totalorder %s9, 4
      %s16 = sphi 0, %s28
      %s17 = sphi 0, %s24
      %s18 = sphi 0, %s16
      %s19 = sphi 0, %s17
      %s20 = sphi 0, %s18
      %s21 = sphi 0, %s19
      %s41 = sphi 0, %s43
      %s44 = sphi 0, %s41
      %s45 = sphi 0, %s44
      %s61 = sphi 0, %s45
      %s67 = sphi 0, %s69
      %s70 = sphi 0, %s67
      %s71 = sphi 0, %s70
      %s87 = sphi 0, %s71
      %s93 = sphi 0, %s95
      %s96 = sphi 0, %s93
      %s97 = sphi 0, %s96
      %s113 = sphi 0, %s97
      %s129 = sphi 0, %s131
      %s132 = sphi 0, %s129
      %s133 = sphi 0, %s132
      %s149 = sphi 0, %s133
    $region4: #{encoder_forward.1} parent=1 // loop_header_branch
      %12 = sbr.rel (%p10) target = $region8
    $region5: #{encoder_forward.1} parent=1 // loop_body
      %s14 = ssub.s32 %s9, 1
      %s15 = ssub.s32 %s9, 2
      %s22 = sadd.s32 1, %s17
      %p23 = scmp.ge.s32.totalorder %s22, 1
      %s24 = scalar_select %p23, 0, %s22
      %s25 = sadd.s32 1, %s16
      %s26 = scalar_select %p23, %s25, %s16
      %p27 = scmp.ge.s32.totalorder %s26, 2
      %s28 = scalar_select %p27, 0, %s26
      %s29 = smul.u32 %s17, 2
      %s30 = ssub.s32 0, %s29
      %s31 = smul.u32 %s16, %s30
      %s32 = sadd.s32 %s17, %s31
      %s33 = smul.u32 %s24, 2
      %s34 = ssub.s32 0, %s33
      %s35 = smul.u32 %s28, %s34
      %s36 = sadd.s32 %s24, %s35
      %s37 = ssub.s32 %s32, %s36
      %s38 = ssub.s32 %s16, %s28
      %s39 = sor.u32 %s37, %s38
      %p40 = scmp.eq.s32.totalorder %s39, 0
      %s42 = sadd.s32 %s41, 1
      %s43 = scalar_select %p40, %s41, %s42
      %p46 = pneg %p40
      %p47 = scmp.eq.s32.totalorder %s9, 1
      %p48 = por %p46, %p47
      %p49 = scmp.ne.s32.totalorder %s41, %s44
      %p50 = scmp.eq.s32.totalorder %s9, 0
      %p51 = por %p49, %p50
      %p52 = scmp.ne.s32.totalorder %s41, %s44
      %p53 = scmp.eq.s32.totalorder %s14, 1
      %p54 = por %p52, %p53
      %p55 = scmp.ne.s32.totalorder %s44, %s45
      %p56 = scmp.eq.s32.totalorder %s14, 0
      %p57 = por %p55, %p56
      %p58 = scmp.ne.s32.totalorder %s44, %s45
      %p59 = scmp.eq.s32.totalorder %s15, 1
      %p60 = por %p58, %p59
      %p62 = scmp.ne.s32.totalorder %s45, %s61
      %p63 = scmp.eq.s32.totalorder %s15, 0
      %p64 = por %p62, %p63
      %s65 = ssub.s32 %s16, %s28
      %p66 = scmp.eq.s32.totalorder %s65, 0
      %s68 = sadd.s32 %s67, 1
      %s69 = scalar_select %p66, %s67, %s68
      %p72 = pneg %p66
      %p73 = scmp.eq.s32.totalorder %s9, 1
      %p74 = por %p72, %p73
      %p75 = scmp.ne.s32.totalorder %s67, %s70
      %p76 = scmp.eq.s32.totalorder %s9, 0
      %p77 = por %p75, %p76
      %p78 = scmp.ne.s32.totalorder %s67, %s70
      %p79 = scmp.eq.s32.totalorder %s14, 1
      %p80 = por %p78, %p79
      %p81 = scmp.ne.s32.totalorder %s70, %s71
      %p82 = scmp.eq.s32.totalorder %s14, 0
      %p83 = por %p81, %p82
      %p84 = scmp.ne.s32.totalorder %s70, %s71
      %p85 = scmp.eq.s32.totalorder %s15, 1
      %p86 = por %p84, %p85
      %p88 = scmp.ne.s32.totalorder %s71, %s87
      %p89 = scmp.eq.s32.totalorder %s15, 0
      %p90 = por %p88, %p89
      %s91 = ssub.s32 %s16, %s28
      %p92 = scmp.eq.s32.totalorder %s91, 0
      %s94 = sadd.s32 %s93, 1
      %s95 = scalar_select %p92, %s93, %s94
      %p98 = pneg %p92
      %p99 = scmp.eq.s32.totalorder %s9, 1
      %p100 = por %p98, %p99
      %p101 = scmp.ne.s32.totalorder %s93, %s96
      %p102 = scmp.eq.s32.totalorder %s9, 0
      %p103 = por %p101, %p102
      %p104 = scmp.ne.s32.totalorder %s93, %s96
      %p105 = scmp.eq.s32.totalorder %s14, 1
      %p106 = por %p104, %p105
      %p107 = scmp.ne.s32.totalorder %s96, %s97
      %p108 = scmp.eq.s32.totalorder %s14, 0
      %p109 = por %p107, %p108
      %p110 = scmp.ne.s32.totalorder %s96, %s97
      %p111 = scmp.eq.s32.totalorder %s15, 1
      %p112 = por %p110, %p111
      %p114 = scmp.ne.s32.totalorder %s97, %s113
      %p115 = scmp.eq.s32.totalorder %s15, 0
      %p116 = por %p114, %p115
      %s117 = smul.u32 %s17, 2
      %s118 = ssub.s32 0, %s117
      %s119 = smul.u32 %s16, %s118
      %s120 = sadd.s32 %s17, %s119
      %s121 = smul.u32 %s24, 2
      %s122 = ssub.s32 0, %s121
      %s123 = smul.u32 %s28, %s122
      %s124 = sadd.s32 %s24, %s123
      %s125 = ssub.s32 %s120, %s124
      %s126 = ssub.s32 %s16, %s28
      %s127 = sor.u32 %s125, %s126
      %p128 = scmp.eq.s32.totalorder %s127, 0
      %s130 = sadd.s32 %s129, 1
      %s131 = scalar_select %p128, %s129, %s130
      %p134 = pneg %p128
      %p135 = scmp.eq.s32.totalorder %s9, 1
      %p136 = por %p134, %p135
      %p137 = scmp.ne.s32.totalorder %s129, %s132
      %p138 = scmp.eq.s32.totalorder %s9, 0
      %p139 = por %p137, %p138
      %p140 = scmp.ne.s32.totalorder %s129, %s132
      %p141 = scmp.eq.s32.totalorder %s14, 1
      %p142 = por %p140, %p141
      %p143 = scmp.ne.s32.totalorder %s132, %s133
      %p144 = scmp.eq.s32.totalorder %s14, 0
      %p145 = por %p143, %p144
      %p146 = scmp.ne.s32.totalorder %s132, %s133
      %p147 = scmp.eq.s32.totalorder %s15, 1
      %p148 = por %p146, %p147
      %p150 = scmp.ne.s32.totalorder %s133, %s149
      %p151 = scmp.eq.s32.totalorder %s15, 0
      %p152 = por %p150, %p151
      %p153 = scmp.le.s32.totalorder 1, %s9
      %p154 = scmp.lt.s32.totalorder %s9, 3
      %p155 = pnand %p153, %p154
      %p156 = pneg %p155
      // Predicated region
      $region9: #{encoder_forward.1} parent=5 // pred_check
        _
      $region10: #{encoder_forward.1} parent=5 // pred_check_branch
        %158 = sbr.rel (%p155) target = $region12
      $region11: #{encoder_forward.1} parent=5 // pred_region
        %s159 = ssub.s32 %s9, 1
      $region12: #{encoder_forward.1} parent=5 // pred_fallthru
        _
      %p160 = scmp.lt.s32.totalorder %s9, 2
      // Predicated region
      $region13: #{encoder_forward.1} parent=5 // pred_check
        %p161 = pneg %p160
      $region14: #{encoder_forward.1} parent=5 // pred_check_branch
        %163 = sbr.rel (%p161) target = $region16
      $region15: #{encoder_forward.1} parent=5 // pred_region
        // Predicated region
        $region17: #{encoder_forward.1} parent=15 // pred_check
          %p164 = pneg %p51
        $region18: #{encoder_forward.1} parent=15 // pred_check_branch
          %166 = sbr.rel (%p164) target = $region20
        $region19: #{encoder_forward.1} parent=15 // pred_region
          %s167 = sand.u32 %s41, 1
          %s168 = sand.u32 %s41, 1
          %s169 = smul.addr %s168, 192
          %s170 = scalar_lea.vmem [#allocation3], %s169
          %s171 = smul.u32 %s17, 2
          %s172 = ssub.s32 0, %s171
          %s173 = smul.u32 %s16, %s172
          %s174 = sadd.s32 %s17, %s173
          %s175 = smul.u32 8, %s174
          %s176 = smul.u32 3, %s16
          %s177 = smul.addr %s175, 12
          %s178 = sadd.s32 %s176, %s177
          %s179 = smul.addr %s178, 4
          %s180 = scalar_lea.vmem %s0, %s179
          // Predicated region
          $region21: #{encoder_forward.1} parent=19 // pred_check
            _
          $region22: #{encoder_forward.1} parent=19 // pred_check_branch
            %182 = sbr.rel (0) target = $region24
          $region23: #{encoder_forward.1} parent=19 // pred_region
            // Predicated region
            $region25: #{encoder_forward.1} parent=23 // pred_check
              _
            $region26: #{encoder_forward.1} parent=23 // pred_check_branch
              %184 = sbr.rel (0) target = $region28
            $region27: #{encoder_forward.1} parent=23 // pred_region
              %s185 = scalar_lea.vmem %s180, 8
              %s186 = scalar_lea.vmem %s170, 8 [#allocation3]
              loop: start=0, step=1, limit=1
              $region29: #{encoder_forward.1} parent=27 // loop_pre_header
                _
              $region30: #{encoder_forward.1} parent=27 // loop_header
                %s188 = sphi 0, %s192
                %p189 = scmp.ge.s32.totalorder %s188, 1
                %s193 = sphi %s180, %s180
                %s194 = sphi %s170, %s170
              $region31: #{encoder_forward.1} parent=27 // loop_header_branch
                %191 = sbr.rel (%p189) target = $region35
              $region32: #{encoder_forward.1} parent=27 // loop_body
                %v195 = vld [vmem:[%s193] sm:$0xff]
                %196 = vst [vmem:[%s194] sm:$0xff] %v195
                %v197 = vld [vmem:[%s193 + $0x18] sm:$0xff]
                %198 = vst [vmem:[%s194 + $0xc] sm:$0xff] %v197
                %v199 = vld [vmem:[%s193 + $0x30] sm:$0xff]
                %200 = vst [vmem:[%s194 + $0x18] sm:$0xff] %v199
                %v201 = vld [vmem:[%s193 + $0x48] sm:$0xff]
                %202 = vst [vmem:[%s194 + $0x24] sm:$0xff] %v201
                %v203 = vld [vmem:[%s193 + $0x60] sm:$0xff]
                %204 = vst [vmem:[%s194 + $0x30] sm:$0xff] %v203
                %v205 = vld [vmem:[%s193 + $0x78] sm:$0xff]
                %206 = vst [vmem:[%s194 + $0x3c] sm:$0xff] %v205
                %v207 = vld [vmem:[%s193 + $0x90] sm:$0xff]
                %208 = vst [vmem:[%s194 + $0x48] sm:$0xff] %v207
                %v209 = vld [vmem:[%s193 + $0xa8] sm:$0xff]
                %210 = vst [vmem:[%s194 + $0x54] sm:$0xff] %v209
                %v211 = vld [vmem:[%s193 + $0xc0] sm:$0xff]
                %212 = vst [vmem:[%s194 + $0x60] sm:$0xff] %v211
                %v213 = vld [vmem:[%s193 + $0xd8] sm:$0xff]
                %214 = vst [vmem:[%s194 + $0x6c] sm:$0xff] %v213
                %v215 = vld [vmem:[%s193 + $0xf0] sm:$0xff]
                %216 = vst [vmem:[%s194 + $0x78] sm:$0xff] %v215
                %v217 = vld [vmem:[%s193 + $0x108] sm:$0xff]
                %218 = vst [vmem:[%s194 + $0x84] sm:$0xff] %v217
                %v219 = vld [vmem:[%s193 + $0x120] sm:$0xff]
                %220 = vst [vmem:[%s194 + $0x90] sm:$0xff] %v219
                %v221 = vld [vmem:[%s193 + $0x138] sm:$0xff]
                %222 = vst [vmem:[%s194 + $0x9c] sm:$0xff] %v221
                %v223 = vld [vmem:[%s193 + $0x150] sm:$0xff]
                %224 = vst [vmem:[%s194 + $0xa8] sm:$0xff] %v223
                %v225 = vld [vmem:[%s193 + $0x168] sm:$0xff]
                %226 = vst [vmem:[%s194 + $0xb4] sm:$0xff] %v225
              $region33: #{encoder_forward.1} parent=27 // loop_footer
                %s192 = sadd.s32 1, %s188
              $region34: #{encoder_forward.1} parent=27 // loop_footer_branch
                %187 = sbr.rel target = $region30
              $region35: #{encoder_forward.1} parent=27 // loop_exit
                _
              loop: start=0, step=1, limit=1
              $region36: #{encoder_forward.1} parent=27 // loop_pre_header
                _
              $region37: #{encoder_forward.1} parent=27 // loop_header
                %s229 = sphi 0, %s233
                %p230 = scmp.ge.s32.totalorder %s229, 1
                %s234 = sphi %s185, %s185
                %s235 = sphi %s186, %s186
              $region38: #{encoder_forward.1} parent=27 // loop_header_branch
                %232 = sbr.rel (%p230) target = $region42
              $region39: #{encoder_forward.1} parent=27 // loop_body
                %v236 = vld [vmem:[%s234] sm:$0xf]
                %237 = vst [vmem:[%s235] sm:$0xf] %v236
                %v238 = vld [vmem:[%s234 + $0x18] sm:$0xf]
                %239 = vst [vmem:[%s235 + $0xc] sm:$0xf] %v238
                %v240 = vld [vmem:[%s234 + $0x30] sm:$0xf]
                %241 = vst [vmem:[%s235 + $0x18] sm:$0xf] %v240
                %v242 = vld [vmem:[%s234 + $0x48] sm:$0xf]
                %243 = vst [vmem:[%s235 + $0x24] sm:$0xf] %v242
                %v244 = vld [vmem:[%s234 + $0x60] sm:$0xf]
                %245 = vst [vmem:[%s235 + $0x30] sm:$0xf] %v244
                %v246 = vld [vmem:[%s234 + $0x78] sm:$0xf]
                %247 = vst [vmem:[%s235 + $0x3c] sm:$0xf] %v246
                %v248 = vld [vmem:[%s234 + $0x90] sm:$0xf]
                %249 = vst [vmem:[%s235 + $0x48] sm:$0xf] %v248
                %v250 = vld [vmem:[%s234 + $0xa8] sm:$0xf]
                %251 = vst [vmem:[%s235 + $0x54] sm:$0xf] %v250
                %v252 = vld [vmem:[%s234 + $0xc0] sm:$0xf]
                %253 = vst [vmem:[%s235 + $0x60] sm:$0xf] %v252
                %v254 = vld [vmem:[%s234 + $0xd8] sm:$0xf]
                %255 = vst [vmem:[%s235 + $0x6c] sm:$0xf] %v254
                %v256 = vld [vmem:[%s234 + $0xf0] sm:$0xf]
                %257 = vst [vmem:[%s235 + $0x78] sm:$0xf] %v256
                %v258 = vld [vmem:[%s234 + $0x108] sm:$0xf]
                %259 = vst [vmem:[%s235 + $0x84] sm:$0xf] %v258
                %v260 = vld [vmem:[%s234 + $0x120] sm:$0xf]
                %261 = vst [vmem:[%s235 + $0x90] sm:$0xf] %v260
                %v262 = vld [vmem:[%s234 + $0x138] sm:$0xf]
                %263 = vst [vmem:[%s235 + $0x9c] sm:$0xf] %v262
                %v264 = vld [vmem:[%s234 + $0x150] sm:$0xf]
                %265 = vst [vmem:[%s235 + $0xa8] sm:$0xf] %v264
                %v266 = vld [vmem:[%s234 + $0x168] sm:$0xf]
                %267 = vst [vmem:[%s235 + $0xb4] sm:$0xf] %v266
              $region40: #{encoder_forward.1} parent=27 // loop_footer
                %s233 = sadd.s32 1, %s229
              $region41: #{encoder_forward.1} parent=27 // loop_footer_branch
                %228 = sbr.rel target = $region37
              $region42: #{encoder_forward.1} parent=27 // loop_exit
                _
            $region28: #{encoder_forward.1} parent=23 // pred_fallthru
              _
          $region24: #{encoder_forward.1} parent=19 // pred_fallthru
            _
          %268 = vnop
        $region20: #{encoder_forward.1} parent=15 // pred_fallthru
          _
        // Predicated region
        $region43: #{encoder_forward.1} parent=15 // pred_check
          %p269 = pneg %p77
        $region44: #{encoder_forward.1} parent=15 // pred_check_branch
          %271 = sbr.rel (%p269) target = $region46
        $region45: #{encoder_forward.1} parent=15 // pred_region
          %s272 = sand.u32 %s67, 1
          %s273 = sand.u32 %s67, 1
          %s274 = smul.addr %s273, 192
          %s275 = scalar_lea.vmem [#allocation4], %s274
          %s276 = smul.u32 3, %s16
          %s277 = smul.addr %s276, 4
          %s278 = scalar_lea.vmem %s1, %s277
          // Predicated region
          $region47: #{encoder_forward.1} parent=45 // pred_check
            _
          $region48: #{encoder_forward.1} parent=45 // pred_check_branch
            %280 = sbr.rel (0) target = $region50
          $region49: #{encoder_forward.1} parent=45 // pred_region
            // Predicated region
            $region51: #{encoder_forward.1} parent=49 // pred_check
              _
            $region52: #{encoder_forward.1} parent=49 // pred_check_branch
              %282 = sbr.rel (0) target = $region54
            $region53: #{encoder_forward.1} parent=49 // pred_region
              %s283 = scalar_lea.vmem %s278, 8
              %s284 = scalar_lea.vmem %s275, 8 [#allocation4]
              loop: start=0, step=1, limit=1
              $region55: #{encoder_forward.1} parent=53 // loop_pre_header
                _
              $region56: #{encoder_forward.1} parent=53 // loop_header
                %s286 = sphi 0, %s290
                %p287 = scmp.ge.s32.totalorder %s286, 1
                %s291 = sphi %s278, %s278
                %s292 = sphi %s275, %s275
              $region57: #{encoder_forward.1} parent=53 // loop_header_branch
                %289 = sbr.rel (%p287) target = $region61
              $region58: #{encoder_forward.1} parent=53 // loop_body
                %v293 = vld [vmem:[%s291] sm:$0xff]
                %294 = vst [vmem:[%s292] sm:$0xff] %v293
                %v295 = vld [vmem:[%s291 + $0x18] sm:$0xff]
                %296 = vst [vmem:[%s292 + $0xc] sm:$0xff] %v295
                %v297 = vld [vmem:[%s291 + $0x30] sm:$0xff]
                %298 = vst [vmem:[%s292 + $0x18] sm:$0xff] %v297
                %v299 = vld [vmem:[%s291 + $0x48] sm:$0xff]
                %300 = vst [vmem:[%s292 + $0x24] sm:$0xff] %v299
                %v301 = vld [vmem:[%s291 + $0x60] sm:$0xff]
                %302 = vst [vmem:[%s292 + $0x30] sm:$0xff] %v301
                %v303 = vld [vmem:[%s291 + $0x78] sm:$0xff]
                %304 = vst [vmem:[%s292 + $0x3c] sm:$0xff] %v303
                %v305 = vld [vmem:[%s291 + $0x90] sm:$0xff]
                %306 = vst [vmem:[%s292 + $0x48] sm:$0xff] %v305
                %v307 = vld [vmem:[%s291 + $0xa8] sm:$0xff]
                %308 = vst [vmem:[%s292 + $0x54] sm:$0xff] %v307
                %v309 = vld [vmem:[%s291 + $0xc0] sm:$0xff]
                %310 = vst [vmem:[%s292 + $0x60] sm:$0xff] %v309
                %v311 = vld [vmem:[%s291 + $0xd8] sm:$0xff]
                %312 = vst [vmem:[%s292 + $0x6c] sm:$0xff] %v311
                %v313 = vld [vmem:[%s291 + $0xf0] sm:$0xff]
                %314 = vst [vmem:[%s292 + $0x78] sm:$0xff] %v313
                %v315 = vld [vmem:[%s291 + $0x108] sm:$0xff]
                %316 = vst [vmem:[%s292 + $0x84] sm:$0xff] %v315
                %v317 = vld [vmem:[%s291 + $0x120] sm:$0xff]
                %318 = vst [vmem:[%s292 + $0x90] sm:$0xff] %v317
                %v319 = vld [vmem:[%s291 + $0x138] sm:$0xff]
                %320 = vst [vmem:[%s292 + $0x9c] sm:$0xff] %v319
                %v321 = vld [vmem:[%s291 + $0x150] sm:$0xff]
                %322 = vst [vmem:[%s292 + $0xa8] sm:$0xff] %v321
                %v323 = vld [vmem:[%s291 + $0x168] sm:$0xff]
                %324 = vst [vmem:[%s292 + $0xb4] sm:$0xff] %v323
              $region59: #{encoder_forward.1} parent=53 // loop_footer
                %s290 = sadd.s32 1, %s286
              $region60: #{encoder_forward.1} parent=53 // loop_footer_branch
                %285 = sbr.rel target = $region56
              $region61: #{encoder_forward.1} parent=53 // loop_exit
                _
              loop: start=0, step=1, limit=1
              $region62: #{encoder_forward.1} parent=53 // loop_pre_header
                _
              $region63: #{encoder_forward.1} parent=53 // loop_header
                %s327 = sphi 0, %s331
                %p328 = scmp.ge.s32.totalorder %s327, 1
                %s332 = sphi %s283, %s283
                %s333 = sphi %s284, %s284
              $region64: #{encoder_forward.1} parent=53 // loop_header_branch
                %330 = sbr.rel (%p328) target = $region68
              $region65: #{encoder_forward.1} parent=53 // loop_body
                %v334 = vld [vmem:[%s332] sm:$0xf]
                %335 = vst [vmem:[%s333] sm:$0xf] %v334
                %v336 = vld [vmem:[%s332 + $0x18] sm:$0xf]
                %337 = vst [vmem:[%s333 + $0xc] sm:$0xf] %v336
                %v338 = vld [vmem:[%s332 + $0x30] sm:$0xf]
                %339 = vst [vmem:[%s333 + $0x18] sm:$0xf] %v338
                %v340 = vld [vmem:[%s332 + $0x48] sm:$0xf]
                %341 = vst [vmem:[%s333 + $0x24] sm:$0xf] %v340
                %v342 = vld [vmem:[%s332 + $0x60] sm:$0xf]
                %343 = vst [vmem:[%s333 + $0x30] sm:$0xf] %v342
                %v344 = vld [vmem:[%s332 + $0x78] sm:$0xf]
                %345 = vst [vmem:[%s333 + $0x3c] sm:$0xf] %v344
                %v346 = vld [vmem:[%s332 + $0x90] sm:$0xf]
                %347 = vst [vmem:[%s333 + $0x48] sm:$0xf] %v346
                %v348 = vld [vmem:[%s332 + $0xa8] sm:$0xf]
                %349 = vst [vmem:[%s333 + $0x54] sm:$0xf] %v348
                %v350 = vld [vmem:[%s332 + $0xc0] sm:$0xf]
                %351 = vst [vmem:[%s333 + $0x60] sm:$0xf] %v350
                %v352 = vld [vmem:[%s332 + $0xd8] sm:$0xf]
                %353 = vst [vmem:[%s333 + $0x6c] sm:$0xf] %v352
                %v354 = vld [vmem:[%s332 + $0xf0] sm:$0xf]
                %355 = vst [vmem:[%s333 + $0x78] sm:$0xf] %v354
                %v356 = vld [vmem:[%s332 + $0x108] sm:$0xf]
                %357 = vst [vmem:[%s333 + $0x84] sm:$0xf] %v356
                %v358 = vld [vmem:[%s332 + $0x120] sm:$0xf]
                %359 = vst [vmem:[%s333 + $0x90] sm:$0xf] %v358
                %v360 = vld [vmem:[%s332 + $0x138] sm:$0xf]
                %361 = vst [vmem:[%s333 + $0x9c] sm:$0xf] %v360
                %v362 = vld [vmem:[%s332 + $0x150] sm:$0xf]
                %363 = vst [vmem:[%s333 + $0xa8] sm:$0xf] %v362
                %v364 = vld [vmem:[%s332 + $0x168] sm:$0xf]
                %365 = vst [vmem:[%s333 + $0xb4] sm:$0xf] %v364
              $region66: #{encoder_forward.1} parent=53 // loop_footer
                %s331 = sadd.s32 1, %s327
              $region67: #{encoder_forward.1} parent=53 // loop_footer_branch
                %326 = sbr.rel target = $region63
              $region68: #{encoder_forward.1} parent=53 // loop_exit
                _
            $region54: #{encoder_forward.1} parent=49 // pred_fallthru
              _
          $region50: #{encoder_forward.1} parent=45 // pred_fallthru
            _
          %366 = vnop
        $region46: #{encoder_forward.1} parent=15 // pred_fallthru
          _
        // Predicated region
        $region69: #{encoder_forward.1} parent=15 // pred_check
          %p367 = pneg %p103
        $region70: #{encoder_forward.1} parent=15 // pred_check_branch
          %369 = sbr.rel (%p367) target = $region72
        $region71: #{encoder_forward.1} parent=15 // pred_region
          %p370 = scmp.lt.s32.totalorder %s16, 1
          %s371 = scalar_select %p370, %s16, 1
          %s372 = scalar_lea.vmem %s2, %s371
        $region72: #{encoder_forward.1} parent=15 // pred_fallthru
          _
      $region16: #{encoder_forward.1} parent=5 // pred_fallthru
        _
      %p373 = scmp.le.s32.totalorder 1, %s9
      %p374 = scmp.lt.s32.totalorder %s9, 3
      %p375 = pnand %p373, %p374
      %p376 = pneg %p375
      // Predicated region
      $region73: #{encoder_forward.1} parent=5 // pred_check
        _
      $region74: #{encoder_forward.1} parent=5 // pred_check_branch
        %378 = sbr.rel (%p375) target = $region76
      $region75: #{encoder_forward.1} parent=5 // pred_region
        %s379 = ssub.s32 %s9, 1
        %s380 = sand.u32 %s44, 1
        %s381 = sand.u32 %s44, 1
        %s382 = smul.addr %s381, 192
        %s383 = scalar_lea.vmem [#allocation3], %s382
        // Predicated region
        $region77: #{encoder_forward.1} parent=75 // pred_check
          %p384 = pneg %p57
        $region78: #{encoder_forward.1} parent=75 // pred_check_branch
          %386 = sbr.rel (%p384) target = $region80
        $region79: #{encoder_forward.1} parent=75 // pred_region
          _
        $region80: #{encoder_forward.1} parent=75 // pred_fallthru
          _
        %s387 = sand.u32 %s70, 1
        %s388 = sand.u32 %s70, 1
        %s389 = smul.addr %s388, 192
        %s390 = scalar_lea.vmem [#allocation4], %s389
        // Predicated region
        $region81: #{encoder_forward.1} parent=75 // pred_check
          %p391 = pneg %p83
        $region82: #{encoder_forward.1} parent=75 // pred_check_branch
          %393 = sbr.rel (%p391) target = $region84
        $region83: #{encoder_forward.1} parent=75 // pred_region
          _
        $region84: #{encoder_forward.1} parent=75 // pred_fallthru
          _
        %s394 = sand.u32 %s44, 1
        %s395 = sand.u32 %s44, 1
        %s396 = smul.addr %s395, 192
        %s397 = scalar_lea.vmem [#allocation3], %s396
        %p398 = pneg %p57
        %p399 = pneg %p54
        %s400 = sand.u32 %s70, 1
        %s401 = sand.u32 %s70, 1
        %s402 = smul.addr %s401, 192
        %s403 = scalar_lea.vmem [#allocation4], %s402
        %p404 = pneg %p83
        %p405 = pneg %p80
        %p406 = scmp.lt.s32.totalorder %s18, 1
        %s407 = scalar_select %p406, %s18, 1
        %s408 = scalar_lea.vmem %s2, %s407
        %p409 = pneg %p109
        %p410 = pneg %p106
        %p411 = pneg %p145
        %p412 = pneg %p142
        %s413 = sand.u32 %s132, 1
        %s414 = sand.u32 %s132, 1
        %s415 = smul.addr %s414, 128
        %s416 = scalar_lea.vmem [#allocation5], %s415
        %s417 = smul.u32 %s19, 2
        %s418 = ssub.s32 0, %s417
        %s419 = smul.u32 %s18, %s418
        %s420 = sadd.s32 %s19, %s419
        %s421 = smul.u32 8, %s420
        %s422 = smul.u32 3, %s18
        %s423 = smul.u32 3, %s18
        %p424 = scmp.lt.s32.totalorder %s18, 1
        %s425 = scalar_select %p424, %s18, 1
        %s426 = scalar_lea.vmem %s2, %s425
        %s427 = smul.u32 %s19, 2
        %s428 = ssub.s32 0, %s427
        %s429 = smul.u32 %s18, %s428
        %s430 = sadd.s32 %s19, %s429
        %s431 = smul.u32 8, %s430
        %p433 = scmp.eq.s32.totalorder %s19, 0
        // Predicated region
        $region85: #{encoder_forward.1} parent=75 // pred_check
          %p434 = pneg %p433
        $region86: #{encoder_forward.1} parent=75 // pred_check_branch
          %436 = sbr.rel (%p434) target = $region88
        $region87: #{encoder_forward.1} parent=75 // pred_region
          %437 = vst [vmem:[#allocation2] sm:$0xff] 0.0
          %438 = vst [vmem:[#allocation2 + $0x8] sm:$0xff] 0.0
        $region88: #{encoder_forward.1} parent=75 // pred_fallthru
          _
        %v439 = vld [vmem:[%s390] sm:$0xff]
        %v440 = vld [vmem:[%s390 + $0x8] sm:$0xf]
        %v441 = vld [vmem:[%s390 + $0xc] sm:$0xff]
        %v442 = vld [vmem:[%s390 + $0x14] sm:$0xf]
        %v443 = vld [vmem:[%s390 + $0x18] sm:$0xff]
        %v444 = vld [vmem:[%s390 + $0x20] sm:$0xf]
        %v445 = vld [vmem:[%s390 + $0x24] sm:$0xff]
        %v446 = vld [vmem:[%s390 + $0x2c] sm:$0xf]
        %v447 = vld [vmem:[%s390 + $0x30] sm:$0xff]
        %v448 = vld [vmem:[%s390 + $0x38] sm:$0xf]
        %v449 = vld [vmem:[%s390 + $0x3c] sm:$0xff]
        %v450 = vld [vmem:[%s390 + $0x44] sm:$0xf]
        %v451 = vld [vmem:[%s390 + $0x48] sm:$0xff]
        %v452 = vld [vmem:[%s390 + $0x50] sm:$0xf]
        %v453 = vld [vmem:[%s390 + $0x54] sm:$0xff]
        %v454 = vld [vmem:[%s390 + $0x5c] sm:$0xf]
        %v455 = vld [vmem:[%s390 + $0x60] sm:$0xff]
        %v456 = vld [vmem:[%s390 + $0x68] sm:$0xf]
        %v457 = vld [vmem:[%s390 + $0x6c] sm:$0xff]
        %v458 = vld [vmem:[%s390 + $0x74] sm:$0xf]
        %v459 = vld [vmem:[%s390 + $0x78] sm:$0xff]
        %v460 = vld [vmem:[%s390 + $0x80] sm:$0xf]
        %v461 = vld [vmem:[%s390 + $0x84] sm:$0xff]
        %v462 = vld [vmem:[%s390 + $0x8c] sm:$0xf]
        %v463 = vld [vmem:[%s390 + $0x90] sm:$0xff]
        %v464 = vld [vmem:[%s390 + $0x98] sm:$0xf]
        %v465 = vld [vmem:[%s390 + $0x9c] sm:$0xff]
        %v466 = vld [vmem:[%s390 + $0xa4] sm:$0xf]
        %v467 = vld [vmem:[%s390 + $0xa8] sm:$0xff]
        %v468 = vld [vmem:[%s390 + $0xb0] sm:$0xf]
        %v469 = vld [vmem:[%s390 + $0xb4] sm:$0xff]
        %v470 = vld [vmem:[%s390 + $0xbc] sm:$0xf]
        %v471 = vld [vmem:[%s426] sm:$0x1]
        %v472 = vld [vmem:[#allocation2] sm:$0xff]
        %v473 = vld [vmem:[#allocation2 + $0x8] sm:$0xff]
        %s474 = smul.u32 %s18, 7
        %s475 = smul.u32 %s474, 6
        %s476 = smul.addr %s475, 4
        %s477 = scalar_lea.vmem %s383, %s476 [#allocation3]
        %v478 = vld [vmem:[%s477] sm:$0xff]
        %v479 = vld [vmem:[%s477 + $0x8] sm:$0xf]
        %v480 = vld [vmem:[%s477 + $0xc] sm:$0xff]
        %v481 = vld [vmem:[%s477 + $0x14] sm:$0xf]
        %v482 = vunpack.c.l.bf16 %v478
        %v483 = vunpack.c.h.bf16 %v478
        %v484 = vunpack.c.l.bf16 %v479
        %v485 = vunpack.c.l.bf16 %v480
        %v486 = vunpack.c.h.bf16 %v480
        %v487 = vunpack.c.l.bf16 %v481
        %v488 = vpack.c.bf16 %v473, %v472
        %v521 = vunpack.c.l.b16 %v439
        %v522 = vunpack.c.h.b16 %v439
        %v523 = vunpack.c.l.b16 %v440
        %v524 = vunpack.c.l.b16 %v441
        %v525 = vunpack.c.h.b16 %v441
        %v526 = vunpack.c.l.b16 %v442
        %v527 = vunpack.c.l.b16 %v443
        %v528 = vunpack.c.h.b16 %v443
        %v529 = vunpack.c.l.b16 %v444
        %v530 = vunpack.c.l.b16 %v445
        %v531 = vunpack.c.h.b16 %v445
        %v532 = vunpack.c.l.b16 %v446
        %v533 = vunpack.c.l.b16 %v447
        %v534 = vunpack.c.h.b16 %v447
        %v535 = vunpack.c.l.b16 %v448
        %v536 = vunpack.c.l.b16 %v449
        %v537 = vunpack.c.h.b16 %v449
        %v538 = vunpack.c.l.b16 %v450
        %v539 = vunpack.c.l.b16 %v451
        %v540 = vunpack.c.h.b16 %v451
        %v541 = vunpack.c.l.b16 %v452
        %v542 = vunpack.c.l.b16 %v453
        %v543 = vunpack.c.h.b16 %v453
        %v544 = vunpack.c.l.b16 %v454
        %v545 = vunpack.c.l.b16 %v455
        %v546 = vunpack.c.h.b16 %v455
        %v547 = vunpack.c.l.b16 %v456
        %v548 = vunpack.c.l.b16 %v457
        %v549 = vunpack.c.h.b16 %v457
        %v550 = vunpack.c.l.b16 %v458
        %v551 = vunpack.c.l.b16 %v459
        %v552 = vunpack.c.h.b16 %v459
        %v553 = vunpack.c.l.b16 %v460
        %v554 = vunpack.c.l.b16 %v461
        %v555 = vunpack.c.h.b16 %v461
        %v556 = vunpack.c.l.b16 %v462
        %v557 = vunpack.c.l.b16 %v463
        %v558 = vunpack.c.h.b16 %v463
        %v559 = vunpack.c.l.b16 %v464
        %v560 = vunpack.c.l.b16 %v465
        %v561 = vunpack.c.h.b16 %v465
        %v562 = vunpack.c.l.b16 %v466
        %v563 = vunpack.c.l.b16 %v467
        %v564 = vunpack.c.h.b16 %v467
        %v565 = vunpack.c.l.b16 %v468
        %v566 = vunpack.c.l.b16 %v469
        %v567 = vunpack.c.h.b16 %v469
        %v568 = vunpack.c.l.b16 %v470
        %v569 = vpack.c.b16 %v524, %v521
        %v570 = vpack.c.b16 %v525, %v522
        %v571 = vpack.c.b16 %v526, %v523
        %v572 = vpack.c.b16 %v530, %v527
        %v573 = vpack.c.b16 %v531, %v528
        %v574 = vpack.c.b16 %v532, %v529
        %v575 = vpack.c.b16 %v536, %v533
        %v576 = vpack.c.b16 %v537, %v534
        %v577 = vpack.c.b16 %v538, %v535
        %v578 = vpack.c.b16 %v542, %v539
        %v579 = vpack.c.b16 %v543, %v540
        %v580 = vpack.c.b16 %v544, %v541
        %v581 = vpack.c.b16 %v548, %v545
        %v582 = vpack.c.b16 %v549, %v546
        %v583 = vpack.c.b16 %v550, %v547
        %v584 = vpack.c.b16 %v554, %v551
        %v585 = vpack.c.b16 %v555, %v552
        %v586 = vpack.c.b16 %v556, %v553
        %v587 = vpack.c.b16 %v560, %v557
        %v588 = vpack.c.b16 %v561, %v558
        %v589 = vpack.c.b16 %v562, %v559
        %v590 = vpack.c.b16 %v566, %v563
        %v591 = vpack.c.b16 %v567, %v564
        %v592 = vpack.c.b16 %v568, %v565
        %617 = vmatprep.subr.bf16.mxu0 %v570
        %618 = vmatpush1.bf16.msra.mxu0 %v569
        %619 = vmatprep.subr.bf16.mxu0 %v573
        %620 = vmatpush1.bf16.msra.mxu0 %v572
        %621 = vmatprep.subr.bf16.mxu0 %v576
        %622 = vmatpush1.bf16.msra.mxu0 %v575
        %623 = vmatprep.subr.bf16.mxu0 %v579
        %624 = vmatpush1.bf16.msra.mxu0 %v578
        %625 = vmatprep.subr.bf16.mxu0 %v582
        %626 = vmatpush1.bf16.msra.mxu0 %v581
        %627 = vmatprep.subr.bf16.mxu0 %v585
        %628 = vmatpush1.bf16.msra.mxu0 %v584
        %629 = vmatprep.subr.bf16.mxu0 %v588
        %630 = vmatpush1.bf16.msra.mxu0 %v587
        %631 = vmatprep.subr.bf16.mxu0 %v591
        %632 = vmatpush1.bf16.msra.mxu0 %v590
        %633 = vmatprep.subr.bf16.mxu0 0
        %634 = vmatpush1.bf16.msra.mxu0 0
        %635 = vmatprep.subr.bf16.mxu0 0
        %636 = vmatpush1.bf16.msra.mxu0 0
        %637 = vmatprep.subr.bf16.mxu0 0
        %638 = vmatpush1.bf16.msra.mxu0 0
        %639 = vmatprep.subr.bf16.mxu0 0
        %640 = vmatpush1.bf16.msra.mxu0 0
        %641 = vmatprep.subr.bf16.mxu0 0
        %642 = vmatpush1.bf16.msra.mxu0 0
        %643 = vmatprep.subr.bf16.mxu0 0
        %644 = vmatpush1.bf16.msra.mxu0 0
        %645 = vmatprep.subr.bf16.mxu0 0
        %646 = vmatpush1.bf16.msra.mxu0 0
        %647 = vmatprep.subr.bf16.mxu0 0
        %648 = vmatpush1.bf16.msra.mxu0 0
        %649 = vmatprep.mubr.bf16.mxu0 0
        %650 = vmatmul.mubr.bf16.gmra.mrb[0].mxu0 %v488
        %v651 = vpop.f32.mrb[0].mxu0
        %v652 = vadd.f32 0.0, %v651
        %v653 = vpop.f32.mrb[0].mxu0
        %v654 = vadd.f32 0.0, %v653
        %v655 = vpop.f32.mrb[0].mxu0
        %v656 = vadd.f32 0.0, %v655
        %v657 = vpop.f32.mrb[0].mxu0
        %v658 = vadd.f32 0.0, %v657
        %659 = vdwg.mxu0
        %660 = vmatprep.subr.bf16.mxu0 0
        %661 = vmatpush1.bf16.msra.mxu0 %v571
        %662 = vmatprep.subr.bf16.mxu0 0
        %663 = vmatpush1.bf16.msra.mxu0 %v574
        %664 = vmatprep.subr.bf16.mxu0 0
        %665 = vmatpush1.bf16.msra.mxu0 %v577
        %666 = vmatprep.subr.bf16.mxu0 0
        %667 = vmatpush1.bf16.msra.mxu0 %v580
        %668 = vmatprep.subr.bf16.mxu0 0
        %669 = vmatpush1.bf16.msra.mxu0 %v583
        %670 = vmatprep.subr.bf16.mxu0 0
        %671 = vmatpush1.bf16.msra.mxu0 %v586
        %672 = vmatprep.subr.bf16.mxu0 0
        %673 = vmatpush1.bf16.msra.mxu0 %v589
        %674 = vmatprep.subr.bf16.mxu0 0
        %675 = vmatpush1.bf16.msra.mxu0 %v592
        %676 = vmatprep.subr.bf16.mxu0 0
        %677 = vmatpush1.bf16.msra.mxu0 0
        %678 = vmatprep.subr.bf16.mxu0 0
        %679 = vmatpush1.bf16.msra.mxu0 0
        %680 = vmatprep.subr.bf16.mxu0 0
        %681 = vmatpush1.bf16.msra.mxu0 0
        %682 = vmatprep.subr.bf16.mxu0 0
        %683 = vmatpush1.bf16.msra.mxu0 0
        %684 = vmatprep.subr.bf16.mxu0 0
        %685 = vmatpush1.bf16.msra.mxu0 0
        %686 = vmatprep.subr.bf16.mxu0 0
        %687 = vmatpush1.bf16.msra.mxu0 0
        %688 = vmatprep.subr.bf16.mxu0 0
        %689 = vmatpush1.bf16.msra.mxu0 0
        %690 = vmatprep.subr.bf16.mxu0 0
        %691 = vmatpush1.bf16.msra.mxu0 0
        %692 = vmatprep.mubr.bf16.mxu0 0
        %693 = vmatmul.mubr.bf16.gmra.mrb[0].mxu0 %v488
        %v694 = vpop.f32.mrb[0].mxu0
        %v695 = vadd.f32 0.0, %v694
        %v696 = vpop.f32.mrb[0].mxu0
        %v697 = vpop.f32.mrb[0].mxu0
        %v698 = vadd.f32 0.0, %v697
        %v699 = vpop.f32.mrb[0].mxu0
        %700 = vdwg.mxu0
        %v701 = vadd.f32 %v482, %v652
        %v702 = vadd.f32 %v485, %v656
        %v703 = vxor.u32 %v701, 2147483648
        %v704 = vxor.u32 %v702, 2147483648
        %v705 = vmul.f32 %v703, 1.442695
        %v706 = vpow.pop %v705
        %v707 = vmul.f32 %v704, 1.442695
        %v708 = vpow.pop %v707
        %v709 = vadd.f32 %v706, 1.0
        %v710 = vadd.f32 %v708, 1.0
        %v711 = vrcp.pop %v709
        %v712 = vmul.f32 1.0, %v711
        %v713 = vrcp.pop %v710
        %v714 = vmul.f32 1.0, %v713
        %v715 = vadd.f32 %v483, %v654
        %v716 = vadd.f32 %v486, %v658
        %v717 = vxor.u32 %v715, 2147483648
        %v718 = vxor.u32 %v716, 2147483648
        %v719 = vmul.f32 %v717, 1.442695
        %v720 = vpow.pop %v719
        %v721 = vmul.f32 %v718, 1.442695
        %v722 = vpow.pop %v721
        %v723 = vadd.f32 %v720, 1.0
        %v724 = vadd.f32 %v722, 1.0
        %v725 = vrcp.pop %v723
        %v726 = vmul.f32 1.0, %v725
        %v727 = vrcp.pop %v724
        %v728 = vmul.f32 1.0, %v727
        %v730 = vlaneseq
        %v731 = vshrl.u32 %v730, 7
        %v732 = vsub.s32 0, %v731
        %v733 = vrot.slane %v471, %v732
        %v735 = vadd.f32 %v695, %v733
        %v736 = vadd.f32 %v698, %v733
        %v737 = vmul.f32 %v712, %v735
        %v738 = vmul.f32 %v714, %v736
        %v739 = vadd.f32 %v484, %v737
        %v740 = vadd.f32 %v487, %v738
        %v741 = vtanh.pop %v739
        %v742 = vtanh.pop %v740
        %v743 = vsub.f32 1.0, %v726
        %v744 = vsub.f32 1.0, %v728
        %v745 = vmul.f32 %v743, %v741
        %v746 = vmul.f32 %v744, %v742
        %v747 = vmul.f32 %v726, %v472
        %v748 = vmul.f32 %v728, %v473
        %v749 = vadd.f32 %v745, %v747
        %v750 = vadd.f32 %v746, %v748
        %s751 = smul.u32 %s474, 16
        %s752 = scalar_lea.vmem %s416, %s751 [#allocation5]
        %753 = vst [vmem:[%s752] sm:$0xff] %v749
        %754 = vst [vmem:[%s752 + $0x8] sm:$0xff] %v750
        %s755 = smul.u32 %s18, 5
        %s756 = sadd.s32 %s755, 1
        %s757 = smul.u32 %s756, 6
        %s758 = smul.addr %s757, 4
        %s759 = scalar_lea.vmem %s383, %s758 [#allocation3]
        %v760 = vld [vmem:[%s759] sm:$0xff]
        %v761 = vld [vmem:[%s759 + $0x8] sm:$0xf]
        %v762 = vld [vmem:[%s759 + $0xc] sm:$0xff]
        %v763 = vld [vmem:[%s759 + $0x14] sm:$0xf]
        %v764 = vunpack.c.l.bf16 %v760
        %v765 = vunpack.c.h.bf16 %v760
        %v766 = vunpack.c.l.bf16 %v761
        %v767 = vunpack.c.l.bf16 %v762
        %v768 = vunpack.c.h.bf16 %v762
        %v769 = vunpack.c.l.bf16 %v763
        %v770 = vpack.c.bf16 %v750, %v749
        %771 = vmatprep.subr.bf16.mxu0 %v570
        %772 = vmatpush1.bf16.msra.mxu0 %v569
        %773 = vmatprep.subr.bf16.mxu0 %v573
        %774 = vmatpush1.bf16.msra.mxu0 %v572
        %775 = vmatprep.subr.bf16.mxu0 %v576
        %776 = vmatpush1.bf16.msra.mxu0 %v575
        %777 = vmatprep.subr.bf16.mxu0 %v579
        %778 = vmatpush1.bf16.msra.mxu0 %v578
        %779 = vmatprep.subr.bf16.mxu0 %v582
        %780 = vmatpush1.bf16.msra.mxu0 %v581
        %781 = vmatprep.subr.bf16.mxu0 %v585
        %782 = vmatpush1.bf16.msra.mxu0 %v584
        %783 = vmatprep.subr.bf16.mxu0 %v588
        %784 = vmatpush1.bf16.msra.mxu0 %v587
        %785 = vmatprep.subr.bf16.mxu0 %v591
        %786 = vmatpush1.bf16.msra.mxu0 %v590
        %787 = vmatprep.subr.bf16.mxu0 0
        %788 = vmatpush1.bf16.msra.mxu0 0
        %789 = vmatprep.subr.bf16.mxu0 0
        %790 = vmatpush1.bf16.msra.mxu0 0
        %791 = vmatprep.subr.bf16.mxu0 0
        %792 = vmatpush1.bf16.msra.mxu0 0
        %793 = vmatprep.subr.bf16.mxu0 0
        %794 = vmatpush1.bf16.msra.mxu0 0
        %795 = vmatprep.subr.bf16.mxu0 0
        %796 = vmatpush1.bf16.msra.mxu0 0
        %797 = vmatprep.subr.bf16.mxu0 0
        %798 = vmatpush1.bf16.msra.mxu0 0
        %799 = vmatprep.subr.bf16.mxu0 0
        %800 = vmatpush1.bf16.msra.mxu0 0
        %801 = vmatprep.subr.bf16.mxu0 0
        %802 = vmatpush1.bf16.msra.mxu0 0
        %803 = vmatprep.mubr.bf16.mxu0 0
        %804 = vmatmul.mubr.bf16.gmra.mrb[0].mxu0 %v770
        %v805 = vpop.f32.mrb[0].mxu0
        %v806 = vadd.f32 0.0, %v805
        %v807 = vpop.f32.mrb[0].mxu0
        %v808 = vadd.f32 0.0, %v807
        %v809 = vpop.f32.mrb[0].mxu0
        %v810 = vadd.f32 0.0, %v809
        %v811 = vpop.f32.mrb[0].mxu0
        %v812 = vadd.f32 0.0, %v811
        %813 = vdwg.mxu0
        %814 = vmatprep.subr.bf16.mxu0 0
        %815 = vmatpush1.bf16.msra.mxu0 %v571
        %816 = vmatprep.subr.bf16.mxu0 0
        %817 = vmatpush1.bf16.msra.mxu0 %v574
        %818 = vmatprep.subr.bf16.mxu0 0
        %819 = vmatpush1.bf16.msra.mxu0 %v577
        %820 = vmatprep.subr.bf16.mxu0 0
        %821 = vmatpush1.bf16.msra.mxu0 %v580
        %822 = vmatprep.subr.bf16.mxu0 0
        %823 = vmatpush1.bf16.msra.mxu0 %v583
        %824 = vmatprep.subr.bf16.mxu0 0
        %825 = vmatpush1.bf16.msra.mxu0 %v586
        %826 = vmatprep.subr.bf16.mxu0 0
        %827 = vmatpush1.bf16.msra.mxu0 %v589
        %828 = vmatprep.subr.bf16.mxu0 0
        %829 = vmatpush1.bf16.msra.mxu0 %v592
        %830 = vmatprep.subr.bf16.mxu0 0
        %831 = vmatpush1.bf16.msra.mxu0 0
        %832 = vmatprep.subr.bf16.mxu0 0
        %833 = vmatpush1.bf16.msra.mxu0 0
        %834 = vmatprep.subr.bf16.mxu0 0
        %835 = vmatpush1.bf16.msra.mxu0 0
        %836 = vmatprep.subr.bf16.mxu0 0
        %837 = vmatpush1.bf16.msra.mxu0 0
        %838 = vmatprep.subr.bf16.mxu0 0
        %839 = vmatpush1.bf16.msra.mxu0 0
        %840 = vmatprep.subr.bf16.mxu0 0
        %841 = vmatpush1.bf16.msra.mxu0 0
        %842 = vmatprep.subr.bf16.mxu0 0
        %843 = vmatpush1.bf16.msra.mxu0 0
        %844 = vmatprep.subr.bf16.mxu0 0
        %845 = vmatpush1.bf16.msra.mxu0 0
        %846 = vmatprep.mubr.bf16.mxu0 0
        %847 = vmatmul.mubr.bf16.gmra.mrb[0].mxu0 %v770
        %v848 = vpop.f32.mrb[0].mxu0
        %v849 = vadd.f32 0.0, %v848
        %v850 = vpop.f32.mrb[0].mxu0
        %v851 = vpop.f32.mrb[0].mxu0
        %v852 = vadd.f32 0.0, %v851
        %v853 = vpop.f32.mrb[0].mxu0
        %854 = vdwg.mxu0
        %v855 = vadd.f32 %v764, %v806
        %v856 = vadd.f32 %v767, %v810
        %v857 = vxor.u32 %v855, 2147483648
        %v858 = vxor.u32 %v856, 2147483648
        %v859 = vmul.f32 %v857, 1.442695
        %v860 = vpow.pop %v859
        %v861 = vmul.f32 %v858, 1.442695
        %v862 = vpow.pop %v861
        %v863 = vadd.f32 %v860, 1.0
        %v864 = vadd.f32 %v862, 1.0
        %v865 = vrcp.pop %v863
        %v866 = vmul.f32 1.0, %v865
        %v867 = vrcp.pop %v864
        %v868 = vmul.f32 1.0, %v867
        %v869 = vadd.f32 %v765, %v808
        %v870 = vadd.f32 %v768, %v812
        %v871 = vxor.u32 %v869, 2147483648
        %v872 = vxor.u32 %v870, 2147483648
        %v873 = vmul.f32 %v871, 1.442695
        %v874 = vpow.pop %v873
        %v875 = vmul.f32 %v872, 1.442695
        %v876 = vpow.pop %v875
        %v877 = vadd.f32 %v874, 1.0
        %v878 = vadd.f32 %v876, 1.0
        %v879 = vrcp.pop %v877
        %v880 = vmul.f32 1.0, %v879
        %v881 = vrcp.pop %v878
        %v882 = vmul.f32 1.0, %v881
        %v883 = vadd.f32 %v849, %v733
        %v884 = vadd.f32 %v852, %v733
        %v885 = vmul.f32 %v866, %v883
        %v886 = vmul.f32 %v868, %v884
        %v887 = vadd.f32 %v766, %v885
        %v888 = vadd.f32 %v769, %v886
        %v889 = vtanh.pop %v887
        %v890 = vtanh.pop %v888
        %v891 = vsub.f32 1.0, %v880
        %v892 = vsub.f32 1.0, %v882
        %v893 = vmul.f32 %v891, %v889
        %v894 = vmul.f32 %v892, %v890
        %v895 = vmul.f32 %v880, %v749
        %v896 = vmul.f32 %v882, %v750
        %v897 = vadd.f32 %v893, %v895
        %v898 = vadd.f32 %v894, %v896
        %s899 = smul.u32 %s756, 16
        %s900 = scalar_lea.vmem %s416, %s899 [#allocation5]
        %901 = vst [vmem:[%s900] sm:$0xff] %v897
        %902 = vst [vmem:[%s900 + $0x8] sm:$0xff] %v898
        %s903 = smul.u32 %s18, 3
        %s904 = sadd.s32 %s903, 2
        %s905 = smul.u32 %s904, 6
        %s906 = smul.addr %s905, 4
        %s907 = scalar_lea.vmem %s383, %s906 [#allocation3]
        %v908 = vld [vmem:[%s907] sm:$0xff]
        %v909 = vld [vmem:[%s907 + $0x8] sm:$0xf]
        %v910 = vld [vmem:[%s907 + $0xc] sm:$0xff]
        %v911 = vld [vmem:[%s907 + $0x14] sm:$0xf]
        %v912 = vunpack.c.l.bf16 %v908
        %v913 = vunpack.c.h.bf16 %v908
        %v914 = vunpack.c.l.bf16 %v909
        %v915 = vunpack.c.l.bf16 %v910
        %v916 = vunpack.c.h.bf16 %v910
        %v917 = vunpack.c.l.bf16 %v911
        %v918 = vpack.c.bf16 %v898, %v897
        %919 = vmatprep.subr.bf16.mxu0 %v570
        %920 = vmatpush1.bf16.msra.mxu0 %v569
        %921 = vmatprep.subr.bf16.mxu0 %v573
        %922 = vmatpush1.bf16.msra.mxu0 %v572
        %923 = vmatprep.subr.bf16.mxu0 %v576
        %924 = vmatpush1.bf16.msra.mxu0 %v575
        %925 = vmatprep.subr.bf16.mxu0 %v579
        %926 = vmatpush1.bf16.msra.mxu0 %v578
        %927 = vmatprep.subr.bf16.mxu0 %v582
        %928 = vmatpush1.bf16.msra.mxu0 %v581
        %929 = vmatprep.subr.bf16.mxu0 %v585
        %930 = vmatpush1.bf16.msra.mxu0 %v584
        %931 = vmatprep.subr.bf16.mxu0 %v588
        %932 = vmatpush1.bf16.msra.mxu0 %v587
        %933 = vmatprep.subr.bf16.mxu0 %v591
        %934 = vmatpush1.bf16.msra.mxu0 %v590
        %935 = vmatprep.subr.bf16.mxu0 0
        %936 = vmatpush1.bf16.msra.mxu0 0
        %937 = vmatprep.subr.bf16.mxu0 0
        %938 = vmatpush1.bf16.msra.mxu0 0
        %939 = vmatprep.subr.bf16.mxu0 0
        %940 = vmatpush1.bf16.msra.mxu0 0
        %941 = vmatprep.subr.bf16.mxu0 0
        %942 = vmatpush1.bf16.msra.mxu0 0
        %943 = vmatprep.subr.bf16.mxu0 0
        %944 = vmatpush1.bf16.msra.mxu0 0
        %945 = vmatprep.subr.bf16.mxu0 0
        %946 = vmatpush1.bf16.msra.mxu0 0
        %947 = vmatprep.subr.bf16.mxu0 0
        %948 = vmatpush1.bf16.msra.mxu0 0
        %949 = vmatprep.subr.bf16.mxu0 0
        %950 = vmatpush1.bf16.msra.mxu0 0
        %951 = vmatprep.mubr.bf16.mxu0 0
        %952 = vmatmul.mubr.bf16.gmra.mrb[0].mxu0 %v918
        %v953 = vpop.f32.mrb[0].mxu0
        %v954 = vadd.f32 0.0, %v953
        %v955 = vpop.f32.mrb[0].mxu0
        %v956 = vadd.f32 0.0, %v955
        %v957 = vpop.f32.mrb[0].mxu0
        %v958 = vadd.f32 0.0, %v957
        %v959 = vpop.f32.mrb[0].mxu0
        %v960 = vadd.f32 0.0, %v959
        %961 = vdwg.mxu0
        %962 = vmatprep.subr.bf16.mxu0 0
        %963 = vmatpush1.bf16.msra.mxu0 %v571
        %964 = vmatprep.subr.bf16.mxu0 0
        %965 = vmatpush1.bf16.msra.mxu0 %v574
        %966 = vmatprep.subr.bf16.mxu0 0
        %967 = vmatpush1.bf16.msra.mxu0 %v577
        %968 = vmatprep.subr.bf16.mxu0 0
        %969 = vmatpush1.bf16.msra.mxu0 %v580
        %970 = vmatprep.subr.bf16.mxu0 0
        %971 = vmatpush1.bf16.msra.mxu0 %v583
        %972 = vmatprep.subr.bf16.mxu0 0
        %973 = vmatpush1.bf16.msra.mxu0 %v586
        %974 = vmatprep.subr.bf16.mxu0 0
        %975 = vmatpush1.bf16.msra.mxu0 %v589
        %976 = vmatprep.subr.bf16.mxu0 0
        %977 = vmatpush1.bf16.msra.mxu0 %v592
        %978 = vmatprep.subr.bf16.mxu0 0
        %979 = vmatpush1.bf16.msra.mxu0 0
        %980 = vmatprep.subr.bf16.mxu0 0
        %981 = vmatpush1.bf16.msra.mxu0 0
        %982 = vmatprep.subr.bf16.mxu0 0
        %983 = vmatpush1.bf16.msra.mxu0 0
        %984 = vmatprep.subr.bf16.mxu0 0
        %985 = vmatpush1.bf16.msra.mxu0 0
        %986 = vmatprep.subr.bf16.mxu0 0
        %987 = vmatpush1.bf16.msra.mxu0 0
        %988 = vmatprep.subr.bf16.mxu0 0
        %989 = vmatpush1.bf16.msra.mxu0 0
        %990 = vmatprep.subr.bf16.mxu0 0
        %991 = vmatpush1.bf16.msra.mxu0 0
        %992 = vmatprep.subr.bf16.mxu0 0
        %993 = vmatpush1.bf16.msra.mxu0 0
        %994 = vmatprep.mubr.bf16.mxu0 0
        %995 = vmatmul.mubr.bf16.gmra.mrb[0].mxu0 %v918
        %v996 = vpop.f32.mrb[0].mxu0
        %v997 = vadd.f32 0.0, %v996
        %v998 = vpop.f32.mrb[0].mxu0
        %v999 = vpop.f32.mrb[0].mxu0
        %v1000 = vadd.f32 0.0, %v999
        %v1001 = vpop.f32.mrb[0].mxu0
        %1002 = vdwg.mxu0
        %v1003 = vadd.f32 %v912, %v954
        %v1004 = vadd.f32 %v915, %v958
        %v1005 = vxor.u32 %v1003, 2147483648
        %v1006 = vxor.u32 %v1004, 2147483648
        %v1007 = vmul.f32 %v1005, 1.442695
        %v1008 = vpow.pop %v1007
        %v1009 = vmul.f32 %v1006, 1.442695
        %v1010 = vpow.pop %v1009
        %v1011 = vadd.f32 %v1008, 1.0
        %v1012 = vadd.f32 %v1010, 1.0
        %v1013 = vrcp.pop %v1011
        %v1014 = vmul.f32 1.0, %v1013
        %v1015 = vrcp.pop %v1012
        %v1016 = vmul.f32 1.0, %v1015
        %v1017 = vadd.f32 %v913, %v956
        %v1018 = vadd.f32 %v916, %v960
        %v1019 = vxor.u32 %v1017, 2147483648
        %v1020 = vxor.u32 %v1018, 2147483648
        %v1021 = vmul.f32 %v1019, 1.442695
        %v1022 = vpow.pop %v1021
        %v1023 = vmul.f32 %v1020, 1.442695
        %v1024 = vpow.pop %v1023
        %v1025 = vadd.f32 %v1022, 1.0
        %v1026 = vadd.f32 %v1024, 1.0
        %v1027 = vrcp.pop %v1025
        %v1028 = vmul.f32 1.0, %v1027
        %v1029 = vrcp.pop %v1026
        %v1030 = vmul.f32 1.0, %v1029
        %v1031 = vadd.f32 %v997, %v733
        %v1032 = vadd.f32 %v1000, %v733
        %v1033 = vmul.f32 %v1014, %v1031
        %v1034 = vmul.f32 %v1016, %v1032
        %v1035 = vadd.f32 %v914, %v1033
        %v1036 = vadd.f32 %v917, %v1034
        %v1037 = vtanh.pop %v1035
        %v1038 = vtanh.pop %v1036
        %v1039 = vsub.f32 1.0, %v1028
        %v1040 = vsub.f32 1.0, %v1030
        %v1041 = vmul.f32 %v1039, %v1037
        %v1042 = vmul.f32 %v1040, %v1038
        %v1043 = vmul.f32 %v1028, %v897
        %v1044 = vmul.f32 %v1030, %v898
        %v1045 = vadd.f32 %v1041, %v1043
        %v1046 = vadd.f32 %v1042, %v1044
        %s1047 = smul.u32 %s904, 16
        %s1048 = scalar_lea.vmem %s416, %s1047 [#allocation5]
        %1049 = vst [vmem:[%s1048] sm:$0xff] %v1045
        %1050 = vst [vmem:[%s1048 + $0x8] sm:$0xff] %v1046
        %s1051 = sadd.s32 %s18, 3
        %s1052 = smul.u32 %s1051, 6
        %s1053 = smul.addr %s1052, 4
        %s1054 = scalar_lea.vmem %s383, %s1053 [#allocation3]
        %v1055 = vld [vmem:[%s1054] sm:$0xff]
        %v1056 = vld [vmem:[%s1054 + $0x8] sm:$0xf]
        %v1057 = vld [vmem:[%s1054 + $0xc] sm:$0xff]
        %v1058 = vld [vmem:[%s1054 + $0x14] sm:$0xf]
        %v1059 = vunpack.c.l.bf16 %v1055
        %v1060 = vunpack.c.h.bf16 %v1055
        %v1061 = vunpack.c.l.bf16 %v1056
        %v1062 = vunpack.c.l.bf16 %v1057
        %v1063 = vunpack.c.h.bf16 %v1057
        %v1064 = vunpack.c.l.bf16 %v1058
        %v1065 = vpack.c.bf16 %v1046, %v1045
        %1066 = vmatprep.subr.bf16.mxu0 %v570
        %1067 = vmatpush1.bf16.msra.mxu0 %v569
        %1068 = vmatprep.subr.bf16.mxu0 %v573
        %1069 = vmatpush1.bf16.msra.mxu0 %v572
        %1070 = vmatprep.subr.bf16.mxu0 %v576
        %1071 = vmatpush1.bf16.msra.mxu0 %v575
        %1072 = vmatprep.subr.bf16.mxu0 %v579
        %1073 = vmatpush1.bf16.msra.mxu0 %v578
        %1074 = vmatprep.subr.bf16.mxu0 %v582
        %1075 = vmatpush1.bf16.msra.mxu0 %v581
        %1076 = vmatprep.subr.bf16.mxu0 %v585
        %1077 = vmatpush1.bf16.msra.mxu0 %v584
        %1078 = vmatprep.subr.bf16.mxu0 %v588
        %1079 = vmatpush1.bf16.msra.mxu0 %v587
        %1080 = vmatprep.subr.bf16.mxu0 %v591
        %1081 = vmatpush1.bf16.msra.mxu0 %v590
        %1082 = vmatprep.subr.bf16.mxu0 0
        %1083 = vmatpush1.bf16.msra.mxu0 0
        %1084 = vmatprep.subr.bf16.mxu0 0
        %1085 = vmatpush1.bf16.msra.mxu0 0
        %1086 = vmatprep.subr.bf16.mxu0 0
        %1087 = vmatpush1.bf16.msra.mxu0 0
        %1088 = vmatprep.subr.bf16.mxu0 0
        %1089 = vmatpush1.bf16.msra.mxu0 0
        %1090 = vmatprep.subr.bf16.mxu0 0
        %1091 = vmatpush1.bf16.msra.mxu0 0
        %1092 = vmatprep.subr.bf16.mxu0 0
        %1093 = vmatpush1.bf16.msra.mxu0 0
        %1094 = vmatprep.subr.bf16.mxu0 0
        %1095 = vmatpush1.bf16.msra.mxu0 0
        %1096 = vmatprep.subr.bf16.mxu0 0
        %1097 = vmatpush1.bf16.msra.mxu0 0
        %1098 = vmatprep.mubr.bf16.mxu0 0
        %1099 = vmatmul.mubr.bf16.gmra.mrb[0].mxu0 %v1065
        %v1100 = vpop.f32.mrb[0].mxu0
        %v1101 = vadd.f32 0.0, %v1100
        %v1102 = vpop.f32.mrb[0].mxu0
        %v1103 = vadd.f32 0.0, %v1102
        %v1104 = vpop.f32.mrb[0].mxu0
        %v1105 = vadd.f32 0.0, %v1104
        %v1106 = vpop.f32.mrb[0].mxu0
        %v1107 = vadd.f32 0.0, %v1106
        %1108 = vdwg.mxu0
        %1109 = vmatprep.subr.bf16.mxu0 0
        %1110 = vmatpush1.bf16.msra.mxu0 %v571
        %1111 = vmatprep.subr.bf16.mxu0 0
        %1112 = vmatpush1.bf16.msra.mxu0 %v574
        %1113 = vmatprep.subr.bf16.mxu0 0
        %1114 = vmatpush1.bf16.msra.mxu0 %v577
        %1115 = vmatprep.subr.bf16.mxu0 0
        %1116 = vmatpush1.bf16.msra.mxu0 %v580
        %1117 = vmatprep.subr.bf16.mxu0 0
        %1118 = vmatpush1.bf16.msra.mxu0 %v583
        %1119 = vmatprep.subr.bf16.mxu0 0
        %1120 = vmatpush1.bf16.msra.mxu0 %v586
        %1121 = vmatprep.subr.bf16.mxu0 0
        %1122 = vmatpush1.bf16.msra.mxu0 %v589
        %1123 = vmatprep.subr.bf16.mxu0 0
        %1124 = vmatpush1.bf16.msra.mxu0 %v592
        %1125 = vmatprep.subr.bf16.mxu0 0
        %1126 = vmatpush1.bf16.msra.mxu0 0
        %1127 = vmatprep.subr.bf16.mxu0 0
        %1128 = vmatpush1.bf16.msra.mxu0 0
        %1129 = vmatprep.subr.bf16.mxu0 0
        %1130 = vmatpush1.bf16.msra.mxu0 0
        %1131 = vmatprep.subr.bf16.mxu0 0
        %1132 = vmatpush1.bf16.msra.mxu0 0
        %1133 = vmatprep.subr.bf16.mxu0 0
        %1134 = vmatpush1.bf16.msra.mxu0 0
        %1135 = vmatprep.subr.bf16.mxu0 0
        %1136 = vmatpush1.bf16.msra.mxu0 0
        %1137 = vmatprep.subr.bf16.mxu0 0
        %1138 = vmatpush1.bf16.msra.mxu0 0
        %1139 = vmatprep.subr.bf16.mxu0 0
        %1140 = vmatpush1.bf16.msra.mxu0 0
        %1141 = vmatprep.mubr.bf16.mxu0 0
        %1142 = vmatmul.mubr.bf16.gmra.mrb[0].mxu0 %v1065
        %v1143 = vpop.f32.mrb[0].mxu0
        %v1144 = vadd.f32 0.0, %v1143
        %v1145 = vpop.f32.mrb[0].mxu0
        %v1146 = vpop.f32.mrb[0].mxu0
        %v1147 = vadd.f32 0.0, %v1146
        %v1148 = vpop.f32.mrb[0].mxu0
        %1149 = vdwg.mxu0
        %v1150 = vadd.f32 %v1059, %v1101
        %v1151 = vadd.f32 %v1062, %v1105
        %v1152 = vxor.u32 %v1150, 2147483648
        %v1153 = vxor.u32 %v1151, 2147483648
        %v1154 = vmul.f32 %v1152, 1.442695
        %v1155 = vpow.pop %v1154
        %v1156 = vmul.f32 %v1153, 1.442695
        %v1157 = vpow.pop %v1156
        %v1158 = vadd.f32 %v1155, 1.0
        %v1159 = vadd.f32 %v1157, 1.0
        %v1160 = vrcp.pop %v1158
        %v1161 = vmul.f32 1.0, %v1160
        %v1162 = vrcp.pop %v1159
        %v1163 = vmul.f32 1.0, %v1162
        %v1164 = vadd.f32 %v1060, %v1103
        %v1165 = vadd.f32 %v1063, %v1107
        %v1166 = vxor.u32 %v1164, 2147483648
        %v1167 = vxor.u32 %v1165, 2147483648
        %v1168 = vmul.f32 %v1166, 1.442695
        %v1169 = vpow.pop %v1168
        %v1170 = vmul.f32 %v1167, 1.442695
        %v1171 = vpow.pop %v1170
        %v1172 = vadd.f32 %v1169, 1.0
        %v1173 = vadd.f32 %v1171, 1.0
        %v1174 = vrcp.pop %v1172
        %v1175 = vmul.f32 1.0, %v1174
        %v1176 = vrcp.pop %v1173
        %v1177 = vmul.f32 1.0, %v1176
        %v1178 = vadd.f32 %v1144, %v733
        %v1179 = vadd.f32 %v1147, %v733
        %v1180 = vmul.f32 %v1161, %v1178
        %v1181 = vmul.f32 %v1163, %v1179
        %v1182 = vadd.f32 %v1061, %v1180
        %v1183 = vadd.f32 %v1064, %v1181
        %v1184 = vtanh.pop %v1182
        %v1185 = vtanh.pop %v1183
        %v1186 = vsub.f32 1.0, %v1175
        %v1187 = vsub.f32 1.0, %v1177
        %v1188 = vmul.f32 %v1186, %v1184
        %v1189 = vmul.f32 %v1187, %v1185
        %v1190 = vmul.f32 %v1175, %v1045
        %v1191 = vmul.f32 %v1177, %v1046
        %v1192 = vadd.f32 %v1188, %v1190
        %v1193 = vadd.f32 %v1189, %v1191
        %s1194 = smul.u32 %s1051, 16
        %s1195 = scalar_lea.vmem %s416, %s1194 [#allocation5]
        %1196 = vst [vmem:[%s1195] sm:$0xff] %v1192
        %1197 = vst [vmem:[%s1195 + $0x8] sm:$0xff] %v1193
        %s1198 = ssub.s32 4, %s18
        %s1199 = smul.u32 %s1198, 6
        %s1200 = smul.addr %s1199, 4
        %s1201 = scalar_lea.vmem %s383, %s1200 [#allocation3]
        %v1202 = vld [vmem:[%s1201] sm:$0xff]
        %v1203 = vld [vmem:[%s1201 + $0x8] sm:$0xf]
        %v1204 = vld [vmem:[%s1201 + $0xc] sm:$0xff]
        %v1205 = vld [vmem:[%s1201 + $0x14] sm:$0xf]
        %v1206 = vunpack.c.l.bf16 %v1202
        %v1207 = vunpack.c.h.bf16 %v1202
        %v1208 = vunpack.c.l.bf16 %v1203
        %v1209 = vunpack.c.l.bf16 %v1204
        %v1210 = vunpack.c.h.bf16 %v1204
        %v1211 = vunpack.c.l.bf16 %v1205
        %v1212 = vpack.c.bf16 %v1193, %v1192
        %1213 = vmatprep.subr.bf16.mxu0 %v570
        %1214 = vmatpush1.bf16.msra.mxu0 %v569
        %1215 = vmatprep.subr.bf16.mxu0 %v573
        %1216 = vmatpush1.bf16.msra.mxu0 %v572
        %1217 = vmatprep.subr.bf16.mxu0 %v576
        %1218 = vmatpush1.bf16.msra.mxu0 %v575
        %1219 = vmatprep.subr.bf16.mxu0 %v579
        %1220 = vmatpush1.bf16.msra.mxu0 %v578
        %1221 = vmatprep.subr.bf16.mxu0 %v582
        %1222 = vmatpush1.bf16.msra.mxu0 %v581
        %1223 = vmatprep.subr.bf16.mxu0 %v585
        %1224 = vmatpush1.bf16.msra.mxu0 %v584
        %1225 = vmatprep.subr.bf16.mxu0 %v588
        %1226 = vmatpush1.bf16.msra.mxu0 %v587
        %1227 = vmatprep.subr.bf16.mxu0 %v591
        %1228 = vmatpush1.bf16.msra.mxu0 %v590
        %1229 = vmatprep.subr.bf16.mxu0 0
        %1230 = vmatpush1.bf16.msra.mxu0 0
        %1231 = vmatprep.subr.bf16.mxu0 0
        %1232 = vmatpush1.bf16.msra.mxu0 0
        %1233 = vmatprep.subr.bf16.mxu0 0
        %1234 = vmatpush1.bf16.msra.mxu0 0
        %1235 = vmatprep.subr.bf16.mxu0 0
        %1236 = vmatpush1.bf16.msra.mxu0 0
        %1237 = vmatprep.subr.bf16.mxu0 0
        %1238 = vmatpush1.bf16.msra.mxu0 0
        %1239 = vmatprep.subr.bf16.mxu0 0
        %1240 = vmatpush1.bf16.msra.mxu0 0
        %1241 = vmatprep.subr.bf16.mxu0 0
        %1242 = vmatpush1.bf16.msra.mxu0 0
        %1243 = vmatprep.subr.bf16.mxu0 0
        %1244 = vmatpush1.bf16.msra.mxu0 0
        %1245 = vmatprep.mubr.bf16.mxu0 0
        %1246 = vmatmul.mubr.bf16.gmra.mrb[0].mxu0 %v1212
        %v1247 = vpop.f32.mrb[0].mxu0
        %v1248 = vadd.f32 0.0, %v1247
        %v1249 = vpop.f32.mrb[0].mxu0
        %v1250 = vadd.f32 0.0, %v1249
        %v1251 = vpop.f32.mrb[0].mxu0
        %v1252 = vadd.f32 0.0, %v1251
        %v1253 = vpop.f32.mrb[0].mxu0
        %v1254 = vadd.f32 0.0, %v1253
        %1255 = vdwg.mxu0
        %1256 = vmatprep.subr.bf16.mxu0 0
        %1257 = vmatpush1.bf16.msra.mxu0 %v571
        %1258 = vmatprep.subr.bf16.mxu0 0
        %1259 = vmatpush1.bf16.msra.mxu0 %v574
        %1260 = vmatprep.subr.bf16.mxu0 0
        %1261 = vmatpush1.bf16.msra.mxu0 %v577
        %1262 = vmatprep.subr.bf16.mxu0 0
        %1263 = vmatpush1.bf16.msra.mxu0 %v580
        %1264 = vmatprep.subr.bf16.mxu0 0
        %1265 = vmatpush1.bf16.msra.mxu0 %v583
        %1266 = vmatprep.subr.bf16.mxu0 0
        %1267 = vmatpush1.bf16.msra.mxu0 %v586
        %1268 = vmatprep.subr.bf16.mxu0 0
        %1269 = vmatpush1.bf16.msra.mxu0 %v589
        %1270 = vmatprep.subr.bf16.mxu0 0
        %1271 = vmatpush1.bf16.msra.mxu0 %v592
        %1272 = vmatprep.subr.bf16.mxu0 0
        %1273 = vmatpush1.bf16.msra.mxu0 0
        %1274 = vmatprep.subr.bf16.mxu0 0
        %1275 = vmatpush1.bf16.msra.mxu0 0
        %1276 = vmatprep.subr.bf16.mxu0 0
        %1277 = vmatpush1.bf16.msra.mxu0 0
        %1278 = vmatprep.subr.bf16.mxu0 0
        %1279 = vmatpush1.bf16.msra.mxu0 0
        %1280 = vmatprep.subr.bf16.mxu0 0
        %1281 = vmatpush1.bf16.msra.mxu0 0
        %1282 = vmatprep.subr.bf16.mxu0 0
        %1283 = vmatpush1.bf16.msra.mxu0 0
        %1284 = vmatprep.subr.bf16.mxu0 0
        %1285 = vmatpush1.bf16.msra.mxu0 0
        %1286 = vmatprep.subr.bf16.mxu0 0
        %1287 = vmatpush1.bf16.msra.mxu0 0
        %1288 = vmatprep.mubr.bf16.mxu0 0
        %1289 = vmatmul.mubr.bf16.gmra.mrb[0].mxu0 %v1212
        %v1290 = vpop.f32.mrb[0].mxu0
        %v1291 = vadd.f32 0.0, %v1290
        %v1292 = vpop.f32.mrb[0].mxu0
        %v1293 = vpop.f32.mrb[0].mxu0
        %v1294 = vadd.f32 0.0, %v1293
        %v1295 = vpop.f32.mrb[0].mxu0
        %1296 = vdwg.mxu0
        %v1297 = vadd.f32 %v1206, %v1248
        %v1298 = vadd.f32 %v1209, %v1252
        %v1299 = vxor.u32 %v1297, 2147483648
        %v1300 = vxor.u32 %v1298, 2147483648
        %v1301 = vmul.f32 %v1299, 1.442695
        %v1302 = vpow.pop %v1301
        %v1303 = vmul.f32 %v1300, 1.442695
        %v1304 = vpow.pop %v1303
        %v1305 = vadd.f32 %v1302, 1.0
        %v1306 = vadd.f32 %v1304, 1.0
        %v1307 = vrcp.pop %v1305
        %v1308 = vmul.f32 1.0, %v1307
        %v1309 = vrcp.pop %v1306
        %v1310 = vmul.f32 1.0, %v1309
        %v1311 = vadd.f32 %v1207, %v1250
        %v1312 = vadd.f32 %v1210, %v1254
        %v1313 = vxor.u32 %v1311, 2147483648
        %v1314 = vxor.u32 %v1312, 2147483648
        %v1315 = vmul.f32 %v1313, 1.442695
        %v1316 = vpow.pop %v1315
        %v1317 = vmul.f32 %v1314, 1.442695
        %v1318 = vpow.pop %v1317
        %v1319 = vadd.f32 %v1316, 1.0
        %v1320 = vadd.f32 %v1318, 1.0
        %v1321 = vrcp.pop %v1319
        %v1322 = vmul.f32 1.0, %v1321
        %v1323 = vrcp.pop %v1320
        %v1324 = vmul.f32 1.0, %v1323
        %v1325 = vadd.f32 %v1291, %v733
        %v1326 = vadd.f32 %v1294, %v733
        %v1327 = vmul.f32 %v1308, %v1325
        %v1328 = vmul.f32 %v1310, %v1326
        %v1329 = vadd.f32 %v1208, %v1327
        %v1330 = vadd.f32 %v1211, %v1328
        %v1331 = vtanh.pop %v1329
        %v1332 = vtanh.pop %v1330
        %v1333 = vsub.f32 1.0, %v1322
        %v1334 = vsub.f32 1.0, %v1324
        %v1335 = vmul.f32 %v1333, %v1331
        %v1336 = vmul.f32 %v1334, %v1332
        %v1337 = vmul.f32 %v1322, %v1192
        %v1338 = vmul.f32 %v1324, %v1193
        %v1339 = vadd.f32 %v1335, %v1337
        %v1340 = vadd.f32 %v1336, %v1338
        %s1341 = smul.u32 %s1198, 16
        %s1342 = scalar_lea.vmem %s416, %s1341 [#allocation5]
        %1343 = vst [vmem:[%s1342] sm:$0xff] %v1339
        %1344 = vst [vmem:[%s1342 + $0x8] sm:$0xff] %v1340
        %s1345 = smul.u32 %s18, 4294967293
        %s1346 = sadd.s32 %s1345, 5
        %s1347 = smul.u32 %s1346, 6
        %s1348 = smul.addr %s1347, 4
        %s1349 = scalar_lea.vmem %s383, %s1348 [#allocation3]
        %v1350 = vld [vmem:[%s1349] sm:$0xff]
        %v1351 = vld [vmem:[%s1349 + $0x8] sm:$0xf]
        %v1352 = vld [vmem:[%s1349 + $0xc] sm:$0xff]
        %v1353 = vld [vmem:[%s1349 + $0x14] sm:$0xf]
        %v1354 = vunpack.c.l.bf16 %v1350
        %v1355 = vunpack.c.h.bf16 %v1350
        %v1356 = vunpack.c.l.bf16 %v1351
        %v1357 = vunpack.c.l.bf16 %v1352
        %v1358 = vunpack.c.h.bf16 %v1352
        %v1359 = vunpack.c.l.bf16 %v1353
        %v1360 = vpack.c.bf16 %v1340, %v1339
        %1361 = vmatprep.subr.bf16.mxu0 %v570
        %1362 = vmatpush1.bf16.msra.mxu0 %v569
        %1363 = vmatprep.subr.bf16.mxu0 %v573
        %1364 = vmatpush1.bf16.msra.mxu0 %v572
        %1365 = vmatprep.subr.bf16.mxu0 %v576
        %1366 = vmatpush1.bf16.msra.mxu0 %v575
        %1367 = vmatprep.subr.bf16.mxu0 %v579
        %1368 = vmatpush1.bf16.msra.mxu0 %v578
        %1369 = vmatprep.subr.bf16.mxu0 %v582
        %1370 = vmatpush1.bf16.msra.mxu0 %v581
        %1371 = vmatprep.subr.bf16.mxu0 %v585
        %1372 = vmatpush1.bf16.msra.mxu0 %v584
        %1373 = vmatprep.subr.bf16.mxu0 %v588
        %1374 = vmatpush1.bf16.msra.mxu0 %v587
        %1375 = vmatprep.subr.bf16.mxu0 %v591
        %1376 = vmatpush1.bf16.msra.mxu0 %v590
        %1377 = vmatprep.subr.bf16.mxu0 0
        %1378 = vmatpush1.bf16.msra.mxu0 0
        %1379 = vmatprep.subr.bf16.mxu0 0
        %1380 = vmatpush1.bf16.msra.mxu0 0
        %1381 = vmatprep.subr.bf16.mxu0 0
        %1382 = vmatpush1.bf16.msra.mxu0 0
        %1383 = vmatprep.subr.bf16.mxu0 0
        %1384 = vmatpush1.bf16.msra.mxu0 0
        %1385 = vmatprep.subr.bf16.mxu0 0
        %1386 = vmatpush1.bf16.msra.mxu0 0
        %1387 = vmatprep.subr.bf16.mxu0 0
        %1388 = vmatpush1.bf16.msra.mxu0 0
        %1389 = vmatprep.subr.bf16.mxu0 0
        %1390 = vmatpush1.bf16.msra.mxu0 0
        %1391 = vmatprep.subr.bf16.mxu0 0
        %1392 = vmatpush1.bf16.msra.mxu0 0
        %1393 = vmatprep.mubr.bf16.mxu0 0
        %1394 = vmatmul.mubr.bf16.gmra.mrb[0].mxu0 %v1360
        %v1395 = vpop.f32.mrb[0].mxu0
        %v1396 = vadd.f32 0.0, %v1395
        %v1397 = vpop.f32.mrb[0].mxu0
        %v1398 = vadd.f32 0.0, %v1397
        %v1399 = vpop.f32.mrb[0].mxu0
        %v1400 = vadd.f32 0.0, %v1399
        %v1401 = vpop.f32.mrb[0].mxu0
        %v1402 = vadd.f32 0.0, %v1401
        %1403 = vdwg.mxu0
        %1404 = vmatprep.subr.bf16.mxu0 0
        %1405 = vmatpush1.bf16.msra.mxu0 %v571
        %1406 = vmatprep.subr.bf16.mxu0 0
        %1407 = vmatpush1.bf16.msra.mxu0 %v574
        %1408 = vmatprep.subr.bf16.mxu0 0
        %1409 = vmatpush1.bf16.msra.mxu0 %v577
        %1410 = vmatprep.subr.bf16.mxu0 0
        %1411 = vmatpush1.bf16.msra.mxu0 %v580
        %1412 = vmatprep.subr.bf16.mxu0 0
        %1413 = vmatpush1.bf16.msra.mxu0 %v583
        %1414 = vmatprep.subr.bf16.mxu0 0
        %1415 = vmatpush1.bf16.msra.mxu0 %v586
        %1416 = vmatprep.subr.bf16.mxu0 0
        %1417 = vmatpush1.bf16.msra.mxu0 %v589
        %1418 = vmatprep.subr.bf16.mxu0 0
        %1419 = vmatpush1.bf16.msra.mxu0 %v592
        %1420 = vmatprep.subr.bf16.mxu0 0
        %1421 = vmatpush1.bf16.msra.mxu0 0
        %1422 = vmatprep.subr.bf16.mxu0 0
        %1423 = vmatpush1.bf16.msra.mxu0 0
        %1424 = vmatprep.subr.bf16.mxu0 0
        %1425 = vmatpush1.bf16.msra.mxu0 0
        %1426 = vmatprep.subr.bf16.mxu0 0
        %1427 = vmatpush1.bf16.msra.mxu0 0
        %1428 = vmatprep.subr.bf16.mxu0 0
        %1429 = vmatpush1.bf16.msra.mxu0 0
        %1430 = vmatprep.subr.bf16.mxu0 0
        %1431 = vmatpush1.bf16.msra.mxu0 0
        %1432 = vmatprep.subr.bf16.mxu0 0
        %1433 = vmatpush1.bf16.msra.mxu0 0
        %1434 = vmatprep.subr.bf16.mxu0 0
        %1435 = vmatpush1.bf16.msra.mxu0 0
        %1436 = vmatprep.mubr.bf16.mxu0 0
        %1437 = vmatmul.mubr.bf16.gmra.mrb[0].mxu0 %v1360
        %v1438 = vpop.f32.mrb[0].mxu0
        %v1439 = vadd.f32 0.0, %v1438
        %v1440 = vpop.f32.mrb[0].mxu0
        %v1441 = vpop.f32.mrb[0].mxu0
        %v1442 = vadd.f32 0.0, %v1441
        %v1443 = vpop.f32.mrb[0].mxu0
        %1444 = vdwg.mxu0
        %v1445 = vadd.f32 %v1354, %v1396
        %v1446 = vadd.f32 %v1357, %v1400
        %v1447 = vxor.u32 %v1445, 2147483648
        %v1448 = vxor.u32 %v1446, 2147483648
        %v1449 = vmul.f32 %v1447, 1.442695
        %v1450 = vpow.pop %v1449
        %v1451 = vmul.f32 %v1448, 1.442695
        %v1452 = vpow.pop %v1451
        %v1453 = vadd.f32 %v1450, 1.0
        %v1454 = vadd.f32 %v1452, 1.0
        %v1455 = vrcp.pop %v1453
        %v1456 = vmul.f32 1.0, %v1455
        %v1457 = vrcp.pop %v1454
        %v1458 = vmul.f32 1.0, %v1457
        %v1459 = vadd.f32 %v1355, %v1398
        %v1460 = vadd.f32 %v1358, %v1402
        %v1461 = vxor.u32 %v1459, 2147483648
        %v1462 = vxor.u32 %v1460, 2147483648
        %v1463 = vmul.f32 %v1461, 1.442695
        %v1464 = vpow.pop %v1463
        %v1465 = vmul.f32 %v1462, 1.442695
        %v1466 = vpow.pop %v1465
        %v1467 = vadd.f32 %v1464, 1.0
        %v1468 = vadd.f32 %v1466, 1.0
        %v1469 = vrcp.pop %v1467
        %v1470 = vmul.f32 1.0, %v1469
        %v1471 = vrcp.pop %v1468
        %v1472 = vmul.f32 1.0, %v1471
        %v1473 = vadd.f32 %v1439, %v733
        %v1474 = vadd.f32 %v1442, %v733
        %v1475 = vmul.f32 %v1456, %v1473
        %v1476 = vmul.f32 %v1458, %v1474
        %v1477 = vadd.f32 %v1356, %v1475
        %v1478 = vadd.f32 %v1359, %v1476
        %v1479 = vtanh.pop %v1477
        %v1480 = vtanh.pop %v1478
        %v1481 = vsub.f32 1.0, %v1470
        %v1482 = vsub.f32 1.0, %v1472
        %v1483 = vmul.f32 %v1481, %v1479
        %v1484 = vmul.f32 %v1482, %v1480
        %v1485 = vmul.f32 %v1470, %v1339
        %v1486 = vmul.f32 %v1472, %v1340
        %v1487 = vadd.f32 %v1483, %v1485
        %v1488 = vadd.f32 %v1484, %v1486
        %s1489 = smul.u32 %s1346, 16
        %s1490 = scalar_lea.vmem %s416, %s1489 [#allocation5]
        %1491 = vst [vmem:[%s1490] sm:$0xff] %v1487
        %1492 = vst [vmem:[%s1490 + $0x8] sm:$0xff] %v1488
        %s1493 = smul.u32 %s18, 4294967291
        %s1494 = sadd.s32 %s1493, 6
        %s1495 = smul.u32 %s1494, 6
        %s1496 = smul.addr %s1495, 4
        %s1497 = scalar_lea.vmem %s383, %s1496 [#allocation3]
        %v1498 = vld [vmem:[%s1497] sm:$0xff]
        %v1499 = vld [vmem:[%s1497 + $0x8] sm:$0xf]
        %v1500 = vld [vmem:[%s1497 + $0xc] sm:$0xff]
        %v1501 = vld [vmem:[%s1497 + $0x14] sm:$0xf]
        %v1502 = vunpack.c.l.bf16 %v1498
        %v1503 = vunpack.c.h.bf16 %v1498
        %v1504 = vunpack.c.l.bf16 %v1499
        %v1505 = vunpack.c.l.bf16 %v1500
        %v1506 = vunpack.c.h.bf16 %v1500
        %v1507 = vunpack.c.l.bf16 %v1501
        %v1508 = vpack.c.bf16 %v1488, %v1487
        %1509 = vmatprep.subr.bf16.mxu0 %v570
        %1510 = vmatpush1.bf16.msra.mxu0 %v569
        %1511 = vmatprep.subr.bf16.mxu0 %v573
        %1512 = vmatpush1.bf16.msra.mxu0 %v572
        %1513 = vmatprep.subr.bf16.mxu0 %v576
        %1514 = vmatpush1.bf16.msra.mxu0 %v575
        %1515 = vmatprep.subr.bf16.mxu0 %v579
        %1516 = vmatpush1.bf16.msra.mxu0 %v578
        %1517 = vmatprep.subr.bf16.mxu0 %v582
        %1518 = vmatpush1.bf16.msra.mxu0 %v581
        %1519 = vmatprep.subr.bf16.mxu0 %v585
        %1520 = vmatpush1.bf16.msra.mxu0 %v584
        %1521 = vmatprep.subr.bf16.mxu0 %v588
        %1522 = vmatpush1.bf16.msra.mxu0 %v587
        %1523 = vmatprep.subr.bf16.mxu0 %v591
        %1524 = vmatpush1.bf16.msra.mxu0 %v590
        %1525 = vmatprep.subr.bf16.mxu0 0
        %1526 = vmatpush1.bf16.msra.mxu0 0
        %1527 = vmatprep.subr.bf16.mxu0 0
        %1528 = vmatpush1.bf16.msra.mxu0 0
        %1529 = vmatprep.subr.bf16.mxu0 0
        %1530 = vmatpush1.bf16.msra.mxu0 0
        %1531 = vmatprep.subr.bf16.mxu0 0
        %1532 = vmatpush1.bf16.msra.mxu0 0
        %1533 = vmatprep.subr.bf16.mxu0 0
        %1534 = vmatpush1.bf16.msra.mxu0 0
        %1535 = vmatprep.subr.bf16.mxu0 0
        %1536 = vmatpush1.bf16.msra.mxu0 0
        %1537 = vmatprep.subr.bf16.mxu0 0
        %1538 = vmatpush1.bf16.msra.mxu0 0
        %1539 = vmatprep.subr.bf16.mxu0 0
        %1540 = vmatpush1.bf16.msra.mxu0 0
        %1541 = vmatprep.mubr.bf16.mxu0 0
        %1542 = vmatmul.mubr.bf16.gmra.mrb[0].mxu0 %v1508
        %v1543 = vpop.f32.mrb[0].mxu0
        %v1544 = vadd.f32 0.0, %v1543
        %v1545 = vpop.f32.mrb[0].mxu0
        %v1546 = vadd.f32 0.0, %v1545
        %v1547 = vpop.f32.mrb[0].mxu0
        %v1548 = vadd.f32 0.0, %v1547
        %v1549 = vpop.f32.mrb[0].mxu0
        %v1550 = vadd.f32 0.0, %v1549
        %1551 = vdwg.mxu0
        %1552 = vmatprep.subr.bf16.mxu0 0
        %1553 = vmatpush1.bf16.msra.mxu0 %v571
        %1554 = vmatprep.subr.bf16.mxu0 0
        %1555 = vmatpush1.bf16.msra.mxu0 %v574
        %1556 = vmatprep.subr.bf16.mxu0 0
        %1557 = vmatpush1.bf16.msra.mxu0 %v577
        %1558 = vmatprep.subr.bf16.mxu0 0
        %1559 = vmatpush1.bf16.msra.mxu0 %v580
        %1560 = vmatprep.subr.bf16.mxu0 0
        %1561 = vmatpush1.bf16.msra.mxu0 %v583
        %1562 = vmatprep.subr.bf16.mxu0 0
        %1563 = vmatpush1.bf16.msra.mxu0 %v586
        %1564 = vmatprep.subr.bf16.mxu0 0
        %1565 = vmatpush1.bf16.msra.mxu0 %v589
        %1566 = vmatprep.subr.bf16.mxu0 0
        %1567 = vmatpush1.bf16.msra.mxu0 %v592
        %1568 = vmatprep.subr.bf16.mxu0 0
        %1569 = vmatpush1.bf16.msra.mxu0 0
        %1570 = vmatprep.subr.bf16.mxu0 0
        %1571 = vmatpush1.bf16.msra.mxu0 0
        %1572 = vmatprep.subr.bf16.mxu0 0
        %1573 = vmatpush1.bf16.msra.mxu0 0
        %1574 = vmatprep.subr.bf16.mxu0 0
        %1575 = vmatpush1.bf16.msra.mxu0 0
        %1576 = vmatprep.subr.bf16.mxu0 0
        %1577 = vmatpush1.bf16.msra.mxu0 0
        %1578 = vmatprep.subr.bf16.mxu0 0
        %1579 = vmatpush1.bf16.msra.mxu0 0
        %1580 = vmatprep.subr.bf16.mxu0 0
        %1581 = vmatpush1.bf16.msra.mxu0 0
        %1582 = vmatprep.subr.bf16.mxu0 0
        %1583 = vmatpush1.bf16.msra.mxu0 0
        %1584 = vmatprep.mubr.bf16.mxu0 0
        %1585 = vmatmul.mubr.bf16.gmra.mrb[0].mxu0 %v1508
        %v1586 = vpop.f32.mrb[0].mxu0
        %v1587 = vadd.f32 0.0, %v1586
        %v1588 = vpop.f32.mrb[0].mxu0
        %v1589 = vpop.f32.mrb[0].mxu0
        %v1590 = vadd.f32 0.0, %v1589
        %v1591 = vpop.f32.mrb[0].mxu0
        %1592 = vdwg.mxu0
        %v1593 = vadd.f32 %v1502, %v1544
        %v1594 = vadd.f32 %v1505, %v1548
        %v1595 = vxor.u32 %v1593, 2147483648
        %v1596 = vxor.u32 %v1594, 2147483648
        %v1597 = vmul.f32 %v1595, 1.442695
        %v1598 = vpow.pop %v1597
        %v1599 = vmul.f32 %v1596, 1.442695
        %v1600 = vpow.pop %v1599
        %v1601 = vadd.f32 %v1598, 1.0
        %v1602 = vadd.f32 %v1600, 1.0
        %v1603 = vrcp.pop %v1601
        %v1604 = vmul.f32 1.0, %v1603
        %v1605 = vrcp.pop %v1602
        %v1606 = vmul.f32 1.0, %v1605
        %v1607 = vadd.f32 %v1503, %v1546
        %v1608 = vadd.f32 %v1506, %v1550
        %v1609 = vxor.u32 %v1607, 2147483648
        %v1610 = vxor.u32 %v1608, 2147483648
        %v1611 = vmul.f32 %v1609, 1.442695
        %v1612 = vpow.pop %v1611
        %v1613 = vmul.f32 %v1610, 1.442695
        %v1614 = vpow.pop %v1613
        %v1615 = vadd.f32 %v1612, 1.0
        %v1616 = vadd.f32 %v1614, 1.0
        %v1617 = vrcp.pop %v1615
        %v1618 = vmul.f32 1.0, %v1617
        %v1619 = vrcp.pop %v1616
        %v1620 = vmul.f32 1.0, %v1619
        %v1621 = vadd.f32 %v1587, %v733
        %v1622 = vadd.f32 %v1590, %v733
        %v1623 = vmul.f32 %v1604, %v1621
        %v1624 = vmul.f32 %v1606, %v1622
        %v1625 = vadd.f32 %v1504, %v1623
        %v1626 = vadd.f32 %v1507, %v1624
        %v1627 = vtanh.pop %v1625
        %v1628 = vtanh.pop %v1626
        %v1629 = vsub.f32 1.0, %v1618
        %v1630 = vsub.f32 1.0, %v1620
        %v1631 = vmul.f32 %v1629, %v1627
        %v1632 = vmul.f32 %v1630, %v1628
        %v1633 = vmul.f32 %v1618, %v1487
        %v1634 = vmul.f32 %v1620, %v1488
        %v1635 = vadd.f32 %v1631, %v1633
        %v1636 = vadd.f32 %v1632, %v1634
        %s1637 = smul.u32 %s1494, 16
        %s1638 = scalar_lea.vmem %s416, %s1637 [#allocation5]
        %1639 = vst [vmem:[%s1638] sm:$0xff] %v1635
        %1640 = vst [vmem:[%s1638 + $0x8] sm:$0xff] %v1636
        %s1641 = smul.u32 %s18, 4294967289
        %s1642 = sadd.s32 %s1641, 7
        %s1643 = smul.u32 %s1642, 6
        %s1644 = smul.addr %s1643, 4
        %s1645 = scalar_lea.vmem %s383, %s1644 [#allocation3]
        %v1646 = vld [vmem:[%s1645] sm:$0xff]
        %v1647 = vld [vmem:[%s1645 + $0x8] sm:$0xf]
        %v1648 = vld [vmem:[%s1645 + $0xc] sm:$0xff]
        %v1649 = vld [vmem:[%s1645 + $0x14] sm:$0xf]
        %v1650 = vunpack.c.l.bf16 %v1646
        %v1651 = vunpack.c.h.bf16 %v1646
        %v1652 = vunpack.c.l.bf16 %v1647
        %v1653 = vunpack.c.l.bf16 %v1648
        %v1654 = vunpack.c.h.bf16 %v1648
        %v1655 = vunpack.c.l.bf16 %v1649
        %v1656 = vpack.c.bf16 %v1636, %v1635
        %1657 = vmatprep.subr.bf16.mxu0 %v570
        %1658 = vmatpush1.bf16.msra.mxu0 %v569
        %1659 = vmatprep.subr.bf16.mxu0 %v573
        %1660 = vmatpush1.bf16.msra.mxu0 %v572
        %1661 = vmatprep.subr.bf16.mxu0 %v576
        %1662 = vmatpush1.bf16.msra.mxu0 %v575
        %1663 = vmatprep.subr.bf16.mxu0 %v579
        %1664 = vmatpush1.bf16.msra.mxu0 %v578
        %1665 = vmatprep.subr.bf16.mxu0 %v582
        %1666 = vmatpush1.bf16.msra.mxu0 %v581
        %1667 = vmatprep.subr.bf16.mxu0 %v585
        %1668 = vmatpush1.bf16.msra.mxu0 %v584
        %1669 = vmatprep.subr.bf16.mxu0 %v588
        %1670 = vmatpush1.bf16.msra.mxu0 %v587
        %1671 = vmatprep.subr.bf16.mxu0 %v591
        %1672 = vmatpush1.bf16.msra.mxu0 %v590
        %1673 = vmatprep.subr.bf16.mxu0 0
        %1674 = vmatpush1.bf16.msra.mxu0 0
        %1675 = vmatprep.subr.bf16.mxu0 0
        %1676 = vmatpush1.bf16.msra.mxu0 0
        %1677 = vmatprep.subr.bf16.mxu0 0
        %1678 = vmatpush1.bf16.msra.mxu0 0
        %1679 = vmatprep.subr.bf16.mxu0 0
        %1680 = vmatpush1.bf16.msra.mxu0 0
        %1681 = vmatprep.subr.bf16.mxu0 0
        %1682 = vmatpush1.bf16.msra.mxu0 0
        %1683 = vmatprep.subr.bf16.mxu0 0
        %1684 = vmatpush1.bf16.msra.mxu0 0
        %1685 = vmatprep.subr.bf16.mxu0 0
        %1686 = vmatpush1.bf16.msra.mxu0 0
        %1687 = vmatprep.subr.bf16.mxu0 0
        %1688 = vmatpush1.bf16.msra.mxu0 0
        %1689 = vmatprep.mubr.bf16.mxu0 0
        %1690 = vmatmul.mubr.bf16.gmra.mrb[0].mxu0 %v1656
        %v1691 = vpop.f32.mrb[0].mxu0
        %v1692 = vadd.f32 0.0, %v1691
        %v1693 = vpop.f32.mrb[0].mxu0
        %v1694 = vadd.f32 0.0, %v1693
        %v1695 = vpop.f32.mrb[0].mxu0
        %v1696 = vadd.f32 0.0, %v1695
        %v1697 = vpop.f32.mrb[0].mxu0
        %v1698 = vadd.f32 0.0, %v1697
        %1699 = vdwg.mxu0
        %1700 = vmatprep.subr.bf16.mxu0 0
        %1701 = vmatpush1.bf16.msra.mxu0 %v571
        %1702 = vmatprep.subr.bf16.mxu0 0
        %1703 = vmatpush1.bf16.msra.mxu0 %v574
        %1704 = vmatprep.subr.bf16.mxu0 0
        %1705 = vmatpush1.bf16.msra.mxu0 %v577
        %1706 = vmatprep.subr.bf16.mxu0 0
        %1707 = vmatpush1.bf16.msra.mxu0 %v580
        %1708 = vmatprep.subr.bf16.mxu0 0
        %1709 = vmatpush1.bf16.msra.mxu0 %v583
        %1710 = vmatprep.subr.bf16.mxu0 0
        %1711 = vmatpush1.bf16.msra.mxu0 %v586
        %1712 = vmatprep.subr.bf16.mxu0 0
        %1713 = vmatpush1.bf16.msra.mxu0 %v589
        %1714 = vmatprep.subr.bf16.mxu0 0
        %1715 = vmatpush1.bf16.msra.mxu0 %v592
        %1716 = vmatprep.subr.bf16.mxu0 0
        %1717 = vmatpush1.bf16.msra.mxu0 0
        %1718 = vmatprep.subr.bf16.mxu0 0
        %1719 = vmatpush1.bf16.msra.mxu0 0
        %1720 = vmatprep.subr.bf16.mxu0 0
        %1721 = vmatpush1.bf16.msra.mxu0 0
        %1722 = vmatprep.subr.bf16.mxu0 0
        %1723 = vmatpush1.bf16.msra.mxu0 0
        %1724 = vmatprep.subr.bf16.mxu0 0
        %1725 = vmatpush1.bf16.msra.mxu0 0
        %1726 = vmatprep.subr.bf16.mxu0 0
        %1727 = vmatpush1.bf16.msra.mxu0 0
        %1728 = vmatprep.subr.bf16.mxu0 0
        %1729 = vmatpush1.bf16.msra.mxu0 0
        %1730 = vmatprep.subr.bf16.mxu0 0
        %1731 = vmatpush1.bf16.msra.mxu0 0
        %1732 = vmatprep.mubr.bf16.mxu0 0
        %1733 = vmatmul.mubr.bf16.gmra.mrb[0].mxu0 %v1656
        %v1734 = vpop.f32.mrb[0].mxu0
        %v1735 = vadd.f32 0.0, %v1734
        %v1736 = vpop.f32.mrb[0].mxu0
        %v1737 = vpop.f32.mrb[0].mxu0
        %v1738 = vadd.f32 0.0, %v1737
        %v1739 = vpop.f32.mrb[0].mxu0
        %1740 = vdwg.mxu0
        %v1741 = vadd.f32 %v1650, %v1692
        %v1742 = vadd.f32 %v1653, %v1696
        %v1743 = vxor.u32 %v1741, 2147483648
        %v1744 = vxor.u32 %v1742, 2147483648
        %v1745 = vmul.f32 %v1743, 1.442695
        %v1746 = vpow.pop %v1745
        %v1747 = vmul.f32 %v1744, 1.442695
        %v1748 = vpow.pop %v1747
        %v1749 = vadd.f32 %v1746, 1.0
        %v1750 = vadd.f32 %v1748, 1.0
        %v1751 = vrcp.pop %v1749
        %v1752 = vmul.f32 1.0, %v1751
        %v1753 = vrcp.pop %v1750
        %v1754 = vmul.f32 1.0, %v1753
        %v1755 = vadd.f32 %v1651, %v1694
        %v1756 = vadd.f32 %v1654, %v1698
        %v1757 = vxor.u32 %v1755, 2147483648
        %v1758 = vxor.u32 %v1756, 2147483648
        %v1759 = vmul.f32 %v1757, 1.442695
        %v1760 = vpow.pop %v1759
        %v1761 = vmul.f32 %v1758, 1.442695
        %v1762 = vpow.pop %v1761
        %v1763 = vadd.f32 %v1760, 1.0
        %v1764 = vadd.f32 %v1762, 1.0
        %v1765 = vrcp.pop %v1763
        %v1766 = vmul.f32 1.0, %v1765
        %v1767 = vrcp.pop %v1764
        %v1768 = vmul.f32 1.0, %v1767
        %v1769 = vadd.f32 %v1735, %v733
        %v1770 = vadd.f32 %v1738, %v733
        %v1771 = vmul.f32 %v1752, %v1769
        %v1772 = vmul.f32 %v1754, %v1770
        %v1773 = vadd.f32 %v1652, %v1771
        %v1774 = vadd.f32 %v1655, %v1772
        %v1775 = vtanh.pop %v1773
        %v1776 = vtanh.pop %v1774
        %v1777 = vsub.f32 1.0, %v1766
        %v1778 = vsub.f32 1.0, %v1768
        %v1779 = vmul.f32 %v1777, %v1775
        %v1780 = vmul.f32 %v1778, %v1776
        %v1781 = vmul.f32 %v1766, %v1635
        %v1782 = vmul.f32 %v1768, %v1636
        %v1783 = vadd.f32 %v1779, %v1781
        %v1784 = vadd.f32 %v1780, %v1782
        %s1785 = smul.u32 %s1642, 16
        %s1786 = scalar_lea.vmem %s416, %s1785 [#allocation5]
        %1787 = vst [vmem:[%s1786] sm:$0xff] %v1783
        %1788 = vst [vmem:[%s1786 + $0x8] sm:$0xff] %v1784
        %1789 = vst [vmem:[#allocation2] sm:$0xff] %v1783
        %1790 = vst [vmem:[#allocation2 + $0x8] sm:$0xff] %v1784
        %s1791 = sand.u32 %s132, 1
        %s1792 = sand.u32 %s132, 1
        %s1793 = smul.addr %s1792, 128
        %s1794 = scalar_lea.vmem [#allocation5], %s1793
        // Predicated region
        $region89: #{encoder_forward.1} parent=75 // pred_check
          %p1795 = pneg %p142
        $region90: #{encoder_forward.1} parent=75 // pred_check_branch
          %1797 = sbr.rel (%p1795) target = $region92
        $region91: #{encoder_forward.1} parent=75 // pred_region
          %s1798 = smul.u32 %s19, 2
          %s1799 = ssub.s32 0, %s1798
          %s1800 = smul.u32 %s18, %s1799
          %s1801 = sadd.s32 %s19, %s1800
          %s1802 = smul.u32 8, %s1801
          %s1803 = smul.addr %s1802, 4
          %s1804 = sadd.s32 %s18, %s1803
          %s1805 = smul.addr %s1804, 8
          %s1806 = scalar_lea.vmem %s3, %s1805
          // Predicated region
          $region93: #{encoder_forward.1} parent=91 // pred_check
            _
          $region94: #{encoder_forward.1} parent=91 // pred_check_branch
            %1808 = sbr.rel (0) target = $region96
          $region95: #{encoder_forward.1} parent=91 // pred_region
            // Predicated region
            $region97: #{encoder_forward.1} parent=95 // pred_check
              _
            $region98: #{encoder_forward.1} parent=95 // pred_check_branch
              %1810 = sbr.rel (0) target = $region100
            $region99: #{encoder_forward.1} parent=95 // pred_region
              // Predicated region
              $region112: #{encoder_forward.1} parent=99 // pred_check
                _
              $region113: #{encoder_forward.1} parent=99 // pred_check_branch
                %1855 = sbr.rel (0) target = $region115
              $region114: #{encoder_forward.1} parent=99 // pred_region
                loop: start=0, step=1, limit=1
                $region116: #{encoder_forward.1} parent=114 // loop_pre_header
                  _
                $region117: #{encoder_forward.1} parent=114 // loop_header
                  %s1857 = sphi 0, %s1861
                  %p1858 = scmp.ge.s32.totalorder %s1857, 1
                  %s1862 = sphi %s1794, %s1794
                  %s1863 = sphi %s1806, %s1806
                $region118: #{encoder_forward.1} parent=114 // loop_header_branch
                  %1860 = sbr.rel (%p1858) target = $region122
                $region119: #{encoder_forward.1} parent=114 // loop_body
                  %v1864 = vld [vmem:[%s1862] sm:$0xff]
                  %1865 = vst [vmem:[%s1863] sm:$0xff] %v1864
                  %v1866 = vld [vmem:[%s1862 + $0x8] sm:$0xff]
                  %1867 = vst [vmem:[%s1863 + $0x10] sm:$0xff] %v1866
                  %v1868 = vld [vmem:[%s1862 + $0x10] sm:$0xff]
                  %1869 = vst [vmem:[%s1863 + $0x20] sm:$0xff] %v1868
                  %v1870 = vld [vmem:[%s1862 + $0x18] sm:$0xff]
                  %1871 = vst [vmem:[%s1863 + $0x30] sm:$0xff] %v1870
                  %v1872 = vld [vmem:[%s1862 + $0x20] sm:$0xff]
                  %1873 = vst [vmem:[%s1863 + $0x40] sm:$0xff] %v1872
                  %v1874 = vld [vmem:[%s1862 + $0x28] sm:$0xff]
                  %1875 = vst [vmem:[%s1863 + $0x50] sm:$0xff] %v1874
                  %v1876 = vld [vmem:[%s1862 + $0x30] sm:$0xff]
                  %1877 = vst [vmem:[%s1863 + $0x60] sm:$0xff] %v1876
                  %v1878 = vld [vmem:[%s1862 + $0x38] sm:$0xff]
                  %1879 = vst [vmem:[%s1863 + $0x70] sm:$0xff] %v1878
                  %v1880 = vld [vmem:[%s1862 + $0x40] sm:$0xff]
                  %1881 = vst [vmem:[%s1863 + $0x80] sm:$0xff] %v1880
                  %v1882 = vld [vmem:[%s1862 + $0x48] sm:$0xff]
                  %1883 = vst [vmem:[%s1863 + $0x90] sm:$0xff] %v1882
                  %v1884 = vld [vmem:[%s1862 + $0x50] sm:$0xff]
                  %1885 = vst [vmem:[%s1863 + $0xa0] sm:$0xff] %v1884
                  %v1886 = vld [vmem:[%s1862 + $0x58] sm:$0xff]
                  %1887 = vst [vmem:[%s1863 + $0xb0] sm:$0xff] %v1886
                  %v1888 = vld [vmem:[%s1862 + $0x60] sm:$0xff]
                  %1889 = vst [vmem:[%s1863 + $0xc0] sm:$0xff] %v1888
                  %v1890 = vld [vmem:[%s1862 + $0x68] sm:$0xff]
                  %1891 = vst [vmem:[%s1863 + $0xd0] sm:$0xff] %v1890
                  %v1892 = vld [vmem:[%s1862 + $0x70] sm:$0xff]
                  %1893 = vst [vmem:[%s1863 + $0xe0] sm:$0xff] %v1892
                  %v1894 = vld [vmem:[%s1862 + $0x78] sm:$0xff]
                  %1895 = vst [vmem:[%s1863 + $0xf0] sm:$0xff] %v1894
                $region120: #{encoder_forward.1} parent=114 // loop_footer
                  %s1861 = sadd.s32 1, %s1857
                $region121: #{encoder_forward.1} parent=114 // loop_footer_branch
                  %1856 = sbr.rel target = $region117
                $region122: #{encoder_forward.1} parent=114 // loop_exit
                  _
              $region115: #{encoder_forward.1} parent=99 // pred_fallthru
                _
              // Predicated region
              $region123: #{encoder_forward.1} parent=99 // pred_check
                _
              $region124: #{encoder_forward.1} parent=99 // pred_check_branch
                %1897 = sbr.rel target = $region126
              $region125: #{encoder_forward.1} parent=99 // pred_region
                _
              $region126: #{encoder_forward.1} parent=99 // pred_fallthru
                _
            $region100: #{encoder_forward.1} parent=95 // pred_fallthru
              _
            // Predicated region
            $region101: #{encoder_forward.1} parent=95 // pred_check
              _
            $region102: #{encoder_forward.1} parent=95 // pred_check_branch
              %1812 = sbr.rel target = $region104
            $region103: #{encoder_forward.1} parent=95 // pred_region
              loop: start=0, step=1, limit=1
              $region105: #{encoder_forward.1} parent=103 // loop_pre_header
                _
              $region106: #{encoder_forward.1} parent=103 // loop_header
                %s1815 = sphi 0, %s1819
                %p1816 = scmp.ge.s32.totalorder %s1815, 1
                %s1820 = sphi %s1794, %s1794
                %s1821 = sphi %s1806, %s1806
              $region107: #{encoder_forward.1} parent=103 // loop_header_branch
                %1818 = sbr.rel (%p1816) target = $region111
              $region108: #{encoder_forward.1} parent=103 // loop_body
                %v1822 = vld [vmem:[%s1820] sm:$0xff]
                %1823 = vst [vmem:[%s1821] sm:$0xff] %v1822
                %v1824 = vld [vmem:[%s1820 + $0x8] sm:$0xff]
                %1825 = vst [vmem:[%s1821 + $0x10] sm:$0xff] %v1824
                %v1826 = vld [vmem:[%s1820 + $0x10] sm:$0xff]
                %1827 = vst [vmem:[%s1821 + $0x20] sm:$0xff] %v1826
                %v1828 = vld [vmem:[%s1820 + $0x18] sm:$0xff]
                %1829 = vst [vmem:[%s1821 + $0x30] sm:$0xff] %v1828
                %v1830 = vld [vmem:[%s1820 + $0x20] sm:$0xff]
                %1831 = vst [vmem:[%s1821 + $0x40] sm:$0xff] %v1830
                %v1832 = vld [vmem:[%s1820 + $0x28] sm:$0xff]
                %1833 = vst [vmem:[%s1821 + $0x50] sm:$0xff] %v1832
                %v1834 = vld [vmem:[%s1820 + $0x30] sm:$0xff]
                %1835 = vst [vmem:[%s1821 + $0x60] sm:$0xff] %v1834
                %v1836 = vld [vmem:[%s1820 + $0x38] sm:$0xff]
                %1837 = vst [vmem:[%s1821 + $0x70] sm:$0xff] %v1836
                %v1838 = vld [vmem:[%s1820 + $0x40] sm:$0xff]
                %1839 = vst [vmem:[%s1821 + $0x80] sm:$0xff] %v1838
                %v1840 = vld [vmem:[%s1820 + $0x48] sm:$0xff]
                %1841 = vst [vmem:[%s1821 + $0x90] sm:$0xff] %v1840
                %v1842 = vld [vmem:[%s1820 + $0x50] sm:$0xff]
                %1843 = vst [vmem:[%s1821 + $0xa0] sm:$0xff] %v1842
                %v1844 = vld [vmem:[%s1820 + $0x58] sm:$0xff]
                %1845 = vst [vmem:[%s1821 + $0xb0] sm:$0xff] %v1844
                %v1846 = vld [vmem:[%s1820 + $0x60] sm:$0xff]
                %1847 = vst [vmem:[%s1821 + $0xc0] sm:$0xff] %v1846
                %v1848 = vld [vmem:[%s1820 + $0x68] sm:$0xff]
                %1849 = vst [vmem:[%s1821 + $0xd0] sm:$0xff] %v1848
                %v1850 = vld [vmem:[%s1820 + $0x70] sm:$0xff]
                %1851 = vst [vmem:[%s1821 + $0xe0] sm:$0xff] %v1850
                %v1852 = vld [vmem:[%s1820 + $0x78] sm:$0xff]
                %1853 = vst [vmem:[%s1821 + $0xf0] sm:$0xff] %v1852
              $region109: #{encoder_forward.1} parent=103 // loop_footer
                %s1819 = sadd.s32 1, %s1815
              $region110: #{encoder_forward.1} parent=103 // loop_footer_branch
                %1814 = sbr.rel target = $region106
              $region111: #{encoder_forward.1} parent=103 // loop_exit
                _
            $region104: #{encoder_forward.1} parent=95 // pred_fallthru
              _
          $region96: #{encoder_forward.1} parent=91 // pred_fallthru
            _
          %1898 = vnop
        $region92: #{encoder_forward.1} parent=75 // pred_fallthru
          _
      $region76: #{encoder_forward.1} parent=5 // pred_fallthru
        _
      %p1899 = scmp.le.s32.totalorder 2, %s9
      // Predicated region
      $region127: #{encoder_forward.1} parent=5 // pred_check
        %p1900 = pneg %p1899
      $region128: #{encoder_forward.1} parent=5 // pred_check_branch
        %1902 = sbr.rel (%p1900) target = $region130
      $region129: #{encoder_forward.1} parent=5 // pred_region
        %s1903 = ssub.s32 %s9, 2
        // Predicated region
        $region131: #{encoder_forward.1} parent=129 // pred_check
          %p1904 = pneg %p148
        $region132: #{encoder_forward.1} parent=129 // pred_check_branch
          %1906 = sbr.rel (%p1904) target = $region134
        $region133: #{encoder_forward.1} parent=129 // pred_region
          %s1907 = sand.u32 %s133, 1
          %s1908 = sand.u32 %s133, 1
          %s1909 = smul.addr %s1908, 128
          %s1910 = scalar_lea.vmem [#allocation5], %s1909
        $region134: #{encoder_forward.1} parent=129 // pred_fallthru
          _
      $region130: #{encoder_forward.1} parent=5 // pred_fallthru
        _
    $region6: #{encoder_forward.1} parent=1 // loop_footer
      %s13 = sadd.s32 1, %s9
    $region7: #{encoder_forward.1} parent=1 // loop_footer_branch
      %8 = sbr.rel target = $region3
    $region8: #{encoder_forward.1} parent=1 // loop_exit
      _

</llo_original>
